<compile_context>
chip_gen: v5e
topology: v5e:2x2
jax: 0.10.0
libtpu: 0.0.40
codegen_flags: <defaults>
</compile_context>

<pallas_src>
import jax
import jax.numpy as jnp
from jax import lax
from jax.experimental import pallas as pl
from jax.experimental.pallas import tpu as pltpu

INPUT_DIM = 13
PAD_IN = 128          # zero-pad input features 13 -> 128 (lane-dense loads)
D_MODEL = 32
NHEAD = 8
D_FF = 2048           # nn.TransformerEncoderLayer default dim_feedforward
NUM_LAYERS = 2
OUTPUT_DIM = 1
LN_EPS = 1e-5


def _round_up(x, m):
    return (x + m - 1) // m * m


def _layernorm(x, g, b, eps=LN_EPS):
    mu = jnp.mean(x, axis=-1, keepdims=True)
    var = jnp.mean((x - mu) ** 2, axis=-1, keepdims=True)   # population variance (PyTorch LayerNorm)
    return (x - mu) * lax.rsqrt(var + eps) * g + b


def transformer_kernel(x_ref, wp_ref, bp_ref,
                       w_attn_ref, b_attn_ref,
                       lin1_w_ref, lin1_b_ref, lin2_w_ref, lin2_b_ref,
                       ln1_w_ref, ln1_b_ref, ln2_w_ref, ln2_b_ref,
                       wfc_ref, bfc_ref, o_ref):
    x = x_ref[...]                                                      # (TB, 128), zero-padded features

    # input_projection: (TB, 128) @ (128, 32) + (1, 32)   (weights already (in, out); no .T)
    h = jnp.dot(x, wp_ref[...], preferred_element_type=jnp.float32) + bp_ref[...]

    for l in range(NUM_LAYERS):
        # --- self-attention block ---
        # seq_len == 1 => softmax over one key == 1, so MHA == out_proj(v_proj(h)).
        # Fused ON HOST with the residual: h + attn(h) == h @ (I + Wa) + ba.
        pre = jnp.dot(h, w_attn_ref[l], preferred_element_type=jnp.float32) + b_attn_ref[l]
        h = _layernorm(pre, ln1_w_ref[l], ln1_b_ref[l])

        # --- feed-forward block (32 -> 2048 -> 32, ReLU); weights stored (in, out) ---
        ff = jnp.dot(h, lin1_w_ref[l], preferred_element_type=jnp.float32) + lin1_b_ref[l]
        ff = jnp.maximum(ff, 0.0)
        ff = jnp.dot(ff, lin2_w_ref[l], preferred_element_type=jnp.float32) + lin2_b_ref[l]
        h = _layernorm(h + ff, ln2_w_ref[l], ln2_b_ref[l])

    # mean over seq dim of length 1 is identity.  Final fc has N=1: VPU mul + lane reduce
    # instead of wasting an MXU pass on a single output column.
    o_ref[...] = jnp.sum(h * wfc_ref[...], axis=-1, keepdims=True) + bfc_ref[...]


def prepare_params(p):
    """Host-side weight prep (once): transpose to (in,out), fuse attention + residual, pad input dim."""
    # input projection: (32, 13) -> padded (128, 32)
    wp_t = jnp.zeros((PAD_IN, D_MODEL), jnp.float32).at[:INPUT_DIM, :].set(p["wp"].T)

    # attention fusion (exact): attn(h) = (h @ v_w.T + v_b) @ out_w.T + out_b
    #                                   =  h @ (v_w.T @ out_w.T) + (v_b @ out_w.T + out_b)
    # plus residual fusion: h + attn(h) = h @ (I + v_w.T @ out_w.T) + (...)
    v_w = p["qkv_w"][:, 2 * D_MODEL:3 * D_MODEL, :]            # (L, 32, 32)  PyTorch (out, in)
    v_b = p["qkv_b"][:, :, 2 * D_MODEL:3 * D_MODEL]            # (L, 1, 32)
    w_attn = jnp.einsum("lki,ljk->lij", v_w, p["out_w"])       # (L, 32, 32)  (in, out) layout
    w_attn = w_attn + jnp.eye(D_MODEL, dtype=jnp.float32)[None]            # fold in residual
    b_attn = jnp.einsum("lrk,ljk->lrj", v_b, p["out_w"]) + p["out_b"]       # (L, 1, 32)

    return {
        "wp": wp_t, "bp": p["bp"],
        "w_attn": w_attn, "b_attn": b_attn,
        "lin1_w": jnp.transpose(p["lin1_w"], (0, 2, 1)),       # (L, 32, 2048)
        "lin1_b": p["lin1_b"],
        "lin2_w": jnp.transpose(p["lin2_w"], (0, 2, 1)),       # (L, 2048, 32)
        "lin2_b": p["lin2_b"],
        "ln1_w": p["ln1_w"], "ln1_b": p["ln1_b"],
        "ln2_w": p["ln2_w"], "ln2_b": p["ln2_b"],
        "wfc": p["wfc"], "bfc": p["bfc"],
    }


def simple_transformer_forward(x, kernel_params, *, batch_tile=None):
    B = x.shape[0]
    if batch_tile is None:
        # Big enough to amortize per-grid-step overhead (~0.35 us/step), small enough that the
        # (TB, 2048) f32 FFN intermediate plus double-buffered I/O tiles fits in v7x's 64 MiB VMEM.
        batch_tile = min(512, _round_up(B, 8))
    tb = batch_tile
    b_pad = _round_up(B, tb)

    # Pad batch to a tile multiple and features 13 -> 128 with zeros (exact).
    x_p = jnp.zeros((b_pad, PAD_IN), jnp.float32).at[:B, :INPUT_DIM].set(x.astype(jnp.float32))

    kp = kernel_params
    weights = (kp["wp"], kp["bp"], kp["w_attn"], kp["b_attn"],
               kp["lin1_w"], kp["lin1_b"], kp["lin2_w"], kp["lin2_b"],
               kp["ln1_w"], kp["ln1_b"], kp["ln2_w"], kp["ln2_b"],
               kp["wfc"], kp["bfc"])

    def whole(a):
        nd = a.ndim
        return pl.BlockSpec(a.shape, lambda i, _nd=nd: (0,) * _nd)   # VMEM-resident across the batch grid

    grid = (b_pad // tb,)
    flops = 2 * b_pad * (PAD_IN * D_MODEL
                         + NUM_LAYERS * (D_MODEL * D_MODEL + 2 * D_MODEL * D_FF)
                         + D_MODEL)
    w_bytes = sum(int(w.size) * w.dtype.itemsize for w in weights)
    bytes_accessed = w_bytes + int(x_p.size) * 4 + b_pad * OUTPUT_DIM * 4

    out = pl.pallas_call(
        transformer_kernel,
        out_shape=jax.ShapeDtypeStruct((b_pad, OUTPUT_DIM), jnp.float32),
        grid=grid,
        in_specs=[pl.BlockSpec((tb, PAD_IN), lambda i: (i, 0))] + [whole(w) for w in weights],
        out_specs=pl.BlockSpec((tb, OUTPUT_DIM), lambda i: (i, 0)),
        compiler_params=pltpu.CompilerParams(
            dimension_semantics=("parallel",),                 # megacore / v7x 2-TC batch split
            vmem_limit_bytes=32 << 20),                        # right-sized (weights ~1.1 MiB)
        cost_estimate=pl.CostEstimate(
            flops=flops,
            transcendentals=2 * NUM_LAYERS * b_pad,            # one rsqrt per LayerNorm row
            bytes_accessed=bytes_accessed),
    )(x_p, *weights)
    return out[:B]


def reference_forward(x, p):
    """Pure-JAX reference on the original PyTorch-layout params (no fusions) for sanity checking."""
    h = x @ p["wp"].T + p["bp"]
    for l in range(NUM_LAYERS):
        qkv = h @ p["qkv_w"][l].T + p["qkv_b"][l]
        v = qkv[:, 2 * D_MODEL:3 * D_MODEL]
        attn = v @ p["out_w"][l].T + p["out_b"][l]
        h = _layernorm(h + attn, p["ln1_w"][l], p["ln1_b"][l])
        ff = jnp.maximum(h @ p["lin1_w"][l].T + p["lin1_b"][l], 0.0)
        ff = ff @ p["lin2_w"][l].T + p["lin2_b"][l]
        h = _layernorm(h + ff, p["ln2_w"][l], p["ln2_b"][l])
    return h @ p["wfc"].T + p["bfc"]


def init_params(key):
    ks = jax.random.split(key, 16)
    n = lambda k, shape, s=0.1: (jax.random.normal(k, shape) * s).astype(jnp.float32)
    return {
        "wp": n(ks[0], (D_MODEL, INPUT_DIM)),
        "bp": n(ks[1], (1, D_MODEL), 0.02),
        # in_proj (q,k,v stacked) per layer, PyTorch MultiheadAttention convention
        "qkv_w": n(ks[2], (NUM_LAYERS, 3 * D_MODEL, D_MODEL)),
        "qkv_b": n(ks[3], (NUM_LAYERS, 1, 3 * D_MODEL), 0.02),
        "out_w": n(ks[4], (NUM_LAYERS, D_MODEL, D_MODEL)),
        "out_b": n(ks[5], (NUM_LAYERS, 1, D_MODEL), 0.02),
        "lin1_w": n(ks[6], (NUM_LAYERS, D_FF, D_MODEL), 0.05),
        "lin1_b": n(ks[7], (NUM_LAYERS, 1, D_FF), 0.02),
        "lin2_w": n(ks[8], (NUM_LAYERS, D_MODEL, D_FF), 0.05),
        "lin2_b": n(ks[9], (NUM_LAYERS, 1, D_MODEL), 0.02),
        "ln1_w": jnp.ones((NUM_LAYERS, 1, D_MODEL), jnp.float32),
        "ln1_b": jnp.zeros((NUM_LAYERS, 1, D_MODEL), jnp.float32),
        "ln2_w": jnp.ones((NUM_LAYERS, 1, D_MODEL), jnp.float32),
        "ln2_b": jnp.zeros((NUM_LAYERS, 1, D_MODEL), jnp.float32),
        "wfc": n(ks[10], (OUTPUT_DIM, D_MODEL)),
        "bfc": n(ks[11], (1, OUTPUT_DIM), 0.02),
    }


if __name__ == "__main__":
    key = jax.random.PRNGKey(0)
    k_params, k_x = jax.random.split(key)
    params = init_params(k_params)
    kparams = prepare_params(params)          # host-side transpose / fuse / pad (once)

    B = 8
    x = jax.random.normal(k_x, (B, INPUT_DIM), dtype=jnp.float32)

    out = simple_transformer_forward(x, kparams)
    out = jax.block_until_ready(out)

    ref = reference_forward(x, params)
    assert out.shape == (B, OUTPUT_DIM), out.shape
    assert jnp.allclose(out, ref, atol=1e-3, rtol=1e-3), (
        f"max abs diff = {jnp.max(jnp.abs(out - ref))}")

    print("KERNEL_OK")
</pallas_src>

<mosaic_0001>
module attributes {stable_mosaic.version = 11 : i64} {
  func.func @transformer_kernel(%arg0: i32, %arg1: memref<8x128xf32, #tpu.memory_space<vmem>>, %arg2: memref<128x32xf32, #tpu.memory_space<vmem>>, %arg3: memref<1x32xf32, #tpu.memory_space<vmem>>, %arg4: memref<2x32x32xf32, #tpu.memory_space<vmem>>, %arg5: memref<2x1x32xf32, #tpu.memory_space<vmem>>, %arg6: memref<2x32x2048xf32, #tpu.memory_space<vmem>>, %arg7: memref<2x1x2048xf32, #tpu.memory_space<vmem>>, %arg8: memref<2x2048x32xf32, #tpu.memory_space<vmem>>, %arg9: memref<2x1x32xf32, #tpu.memory_space<vmem>>, %arg10: memref<2x1x32xf32, #tpu.memory_space<vmem>>, %arg11: memref<2x1x32xf32, #tpu.memory_space<vmem>>, %arg12: memref<2x1x32xf32, #tpu.memory_space<vmem>>, %arg13: memref<2x1x32xf32, #tpu.memory_space<vmem>>, %arg14: memref<1x32xf32, #tpu.memory_space<vmem>>, %arg15: memref<1x1xf32, #tpu.memory_space<vmem>>, %arg16: memref<8x1xf32, #tpu.memory_space<vmem>>) attributes {dimension_semantics = [#tpu.dimension_semantics<parallel>], iteration_bounds = array<i64: 1>, scalar_prefetch = 0 : i64, scratch_operands = 0 : i64, tpu.core_type = #tpu.core_type<tc>, window_params = [{transform_indices = @transform_0, window_bounds = array<i64: 8, 128>}, {pipeline_mode = #tpu.pipeline_mode<synchronous>, transform_indices = @transform_1, window_bounds = array<i64: 128, 32>}, {pipeline_mode = #tpu.pipeline_mode<synchronous>, transform_indices = @transform_2, window_bounds = array<i64: 1, 32>}, {pipeline_mode = #tpu.pipeline_mode<synchronous>, transform_indices = @transform_3, window_bounds = array<i64: 2, 32, 32>}, {pipeline_mode = #tpu.pipeline_mode<synchronous>, transform_indices = @transform_4, window_bounds = array<i64: 2, 1, 32>}, {pipeline_mode = #tpu.pipeline_mode<synchronous>, transform_indices = @transform_5, window_bounds = array<i64: 2, 32, 2048>}, {pipeline_mode = #tpu.pipeline_mode<synchronous>, transform_indices = @transform_6, window_bounds = array<i64: 2, 1, 2048>}, {pipeline_mode = #tpu.pipeline_mode<synchronous>, transform_indices = @transform_7, window_bounds = array<i64: 2, 2048, 32>}, {pipeline_mode = #tpu.pipeline_mode<synchronous>, transform_indices = @transform_8, window_bounds = array<i64: 2, 1, 32>}, {pipeline_mode = #tpu.pipeline_mode<synchronous>, transform_indices = @transform_9, window_bounds = array<i64: 2, 1, 32>}, {pipeline_mode = #tpu.pipeline_mode<synchronous>, transform_indices = @transform_10, window_bounds = array<i64: 2, 1, 32>}, {pipeline_mode = #tpu.pipeline_mode<synchronous>, transform_indices = @transform_11, window_bounds = array<i64: 2, 1, 32>}, {pipeline_mode = #tpu.pipeline_mode<synchronous>, transform_indices = @transform_12, window_bounds = array<i64: 2, 1, 32>}, {pipeline_mode = #tpu.pipeline_mode<synchronous>, transform_indices = @transform_13, window_bounds = array<i64: 1, 32>}, {pipeline_mode = #tpu.pipeline_mode<synchronous>, transform_indices = @transform_14, window_bounds = array<i64: 1, 1>}, {transform_indices = @transform_15, window_bounds = array<i64: 8, 1>}]} {
    %c0 = arith.constant 0 : index
    %c0_0 = arith.constant 0 : index
    %0 = vector.load %arg1[%c0, %c0_0] : memref<8x128xf32, #tpu.memory_space<vmem>>, vector<8x128xf32>
    %c0_1 = arith.constant 0 : index
    %c0_2 = arith.constant 0 : index
    %1 = vector.load %arg2[%c0_1, %c0_2] : memref<128x32xf32, #tpu.memory_space<vmem>>, vector<128x32xf32>
    %cst = arith.constant dense<0.000000e+00> : vector<8x32xf32>
    %2 = tpu.matmul %0, %1, %cst {dimension_numbers = #tpu.dot_dimension_numbers<[1], [0], [0], [1], [0, 0, 1, 1], [], []>} : vector<8x128xf32>, vector<128x32xf32>, vector<8x32xf32> -> vector<8x32xf32>
    %c0_3 = arith.constant 0 : index
    %c0_4 = arith.constant 0 : index
    %3 = vector.load %arg3[%c0_3, %c0_4] : memref<1x32xf32, #tpu.memory_space<vmem>>, vector<1x32xf32>
    %4 = vector.broadcast %3 : vector<1x32xf32> to vector<8x32xf32>
    %5 = arith.addf %2, %4 : vector<8x32xf32>
    %c0_5 = arith.constant 0 : index
    %c0_6 = arith.constant 0 : index
    %c0_7 = arith.constant 0 : index
    %6 = vector.load %arg4[%c0_5, %c0_6, %c0_7] : memref<2x32x32xf32, #tpu.memory_space<vmem>>, vector<1x32x32xf32>
    %7 = vector.shape_cast %6 : vector<1x32x32xf32> to vector<32x32xf32>
    %cst_8 = arith.constant dense<0.000000e+00> : vector<8x32xf32>
    %8 = tpu.matmul %5, %7, %cst_8 {dimension_numbers = #tpu.dot_dimension_numbers<[1], [0], [0], [1], [0, 0, 1, 1], [], []>} : vector<8x32xf32>, vector<32x32xf32>, vector<8x32xf32> -> vector<8x32xf32>
    %c0_9 = arith.constant 0 : index
    %c0_10 = arith.constant 0 : index
    %c0_11 = arith.constant 0 : index
    %9 = vector.load %arg5[%c0_9, %c0_10, %c0_11] : memref<2x1x32xf32, #tpu.memory_space<vmem>>, vector<1x1x32xf32>
    %10 = vector.shape_cast %9 : vector<1x1x32xf32> to vector<1x32xf32>
    %11 = vector.broadcast %10 : vector<1x32xf32> to vector<8x32xf32>
    %12 = arith.addf %8, %11 : vector<8x32xf32>
    %c0_12 = arith.constant 0 : index
    %c0_13 = arith.constant 0 : index
    %c0_14 = arith.constant 0 : index
    %13 = vector.load %arg10[%c0_12, %c0_13, %c0_14] : memref<2x1x32xf32, #tpu.memory_space<vmem>>, vector<1x1x32xf32>
    %14 = vector.shape_cast %13 : vector<1x1x32xf32> to vector<1x32xf32>
    %c0_15 = arith.constant 0 : index
    %c0_16 = arith.constant 0 : index
    %c0_17 = arith.constant 0 : index
    %15 = vector.load %arg11[%c0_15, %c0_16, %c0_17] : memref<2x1x32xf32, #tpu.memory_space<vmem>>, vector<1x1x32xf32>
    %16 = vector.shape_cast %15 : vector<1x1x32xf32> to vector<1x32xf32>
    %cst_18 = arith.constant dense<0.000000e+00> : vector<8xf32>
    %17 = vector.multi_reduction <add>, %12, %cst_18 [1] : vector<8x32xf32> to vector<8xf32>
    %18 = vector.shape_cast %17 : vector<8xf32> to vector<8x1xf32>
    %cst_19 = arith.constant 3.200000e+01 : f32
    %19 = vector.broadcast %cst_19 : f32 to vector<8x1xf32>
    %20 = arith.divf %18, %19 : vector<8x1xf32>
    %21 = vector.broadcast %20 : vector<8x1xf32> to vector<8x32xf32>
    %22 = arith.subf %12, %21 : vector<8x32xf32>
    %23 = arith.mulf %22, %22 : vector<8x32xf32>
    %cst_20 = arith.constant dense<0.000000e+00> : vector<8xf32>
    %24 = vector.multi_reduction <add>, %23, %cst_20 [1] : vector<8x32xf32> to vector<8xf32>
    %25 = vector.shape_cast %24 : vector<8xf32> to vector<8x1xf32>
    %cst_21 = arith.constant 3.200000e+01 : f32
    %26 = vector.broadcast %cst_21 : f32 to vector<8x1xf32>
    %27 = arith.divf %25, %26 : vector<8x1xf32>
    %28 = vector.broadcast %20 : vector<8x1xf32> to vector<8x32xf32>
    %29 = arith.subf %12, %28 : vector<8x32xf32>
    %cst_22 = arith.constant 9.99999974E-6 : f32
    %30 = vector.broadcast %cst_22 : f32 to vector<8x1xf32>
    %31 = arith.addf %27, %30 : vector<8x1xf32>
    %32 = math.rsqrt %31 : vector<8x1xf32>
    %33 = vector.broadcast %32 : vector<8x1xf32> to vector<8x32xf32>
    %34 = arith.mulf %29, %33 : vector<8x32xf32>
    %35 = vector.broadcast %14 : vector<1x32xf32> to vector<8x32xf32>
    %36 = arith.mulf %34, %35 : vector<8x32xf32>
    %37 = vector.broadcast %16 : vector<1x32xf32> to vector<8x32xf32>
    %38 = arith.addf %36, %37 : vector<8x32xf32>
    %c0_23 = arith.constant 0 : index
    %c0_24 = arith.constant 0 : index
    %c0_25 = arith.constant 0 : index
    %39 = vector.load %arg6[%c0_23, %c0_24, %c0_25] : memref<2x32x2048xf32, #tpu.memory_space<vmem>>, vector<1x32x2048xf32>
    %40 = vector.shape_cast %39 : vector<1x32x2048xf32> to vector<32x2048xf32>
    %cst_26 = arith.constant dense<0.000000e+00> : vector<8x2048xf32>
    %41 = tpu.matmul %38, %40, %cst_26 {dimension_numbers = #tpu.dot_dimension_numbers<[1], [0], [0], [1], [0, 0, 1, 1], [], []>} : vector<8x32xf32>, vector<32x2048xf32>, vector<8x2048xf32> -> vector<8x2048xf32>
    %c0_27 = arith.constant 0 : index
    %c0_28 = arith.constant 0 : index
    %c0_29 = arith.constant 0 : index
    %42 = vector.load %arg7[%c0_27, %c0_28, %c0_29] : memref<2x1x2048xf32, #tpu.memory_space<vmem>>, vector<1x1x2048xf32>
    %43 = vector.shape_cast %42 : vector<1x1x2048xf32> to vector<1x2048xf32>
    %44 = vector.broadcast %43 : vector<1x2048xf32> to vector<8x2048xf32>
    %45 = arith.addf %41, %44 : vector<8x2048xf32>
    %cst_30 = arith.constant 0.000000e+00 : f32
    %46 = vector.broadcast %cst_30 : f32 to vector<8x2048xf32>
    %47 = arith.maximumf %45, %46 : vector<8x2048xf32>
    %c0_31 = arith.constant 0 : index
    %c0_32 = arith.constant 0 : index
    %c0_33 = arith.constant 0 : index
    %48 = vector.load %arg8[%c0_31, %c0_32, %c0_33] : memref<2x2048x32xf32, #tpu.memory_space<vmem>>, vector<1x2048x32xf32>
    %49 = vector.shape_cast %48 : vector<1x2048x32xf32> to vector<2048x32xf32>
    %cst_34 = arith.constant dense<0.000000e+00> : vector<8x32xf32>
    %50 = tpu.matmul %47, %49, %cst_34 {dimension_numbers = #tpu.dot_dimension_numbers<[1], [0], [0], [1], [0, 0, 1, 1], [], []>} : vector<8x2048xf32>, vector<2048x32xf32>, vector<8x32xf32> -> vector<8x32xf32>
    %c0_35 = arith.constant 0 : index
    %c0_36 = arith.constant 0 : index
    %c0_37 = arith.constant 0 : index
    %51 = vector.load %arg9[%c0_35, %c0_36, %c0_37] : memref<2x1x32xf32, #tpu.memory_space<vmem>>, vector<1x1x32xf32>
    %52 = vector.shape_cast %51 : vector<1x1x32xf32> to vector<1x32xf32>
    %53 = vector.broadcast %52 : vector<1x32xf32> to vector<8x32xf32>
    %54 = arith.addf %50, %53 : vector<8x32xf32>
    %55 = arith.addf %38, %54 : vector<8x32xf32>
    %c0_38 = arith.constant 0 : index
    %c0_39 = arith.constant 0 : index
    %c0_40 = arith.constant 0 : index
    %56 = vector.load %arg12[%c0_38, %c0_39, %c0_40] : memref<2x1x32xf32, #tpu.memory_space<vmem>>, vector<1x1x32xf32>
    %57 = vector.shape_cast %56 : vector<1x1x32xf32> to vector<1x32xf32>
    %c0_41 = arith.constant 0 : index
    %c0_42 = arith.constant 0 : index
    %c0_43 = arith.constant 0 : index
    %58 = vector.load %arg13[%c0_41, %c0_42, %c0_43] : memref<2x1x32xf32, #tpu.memory_space<vmem>>, vector<1x1x32xf32>
    %59 = vector.shape_cast %58 : vector<1x1x32xf32> to vector<1x32xf32>
    %cst_44 = arith.constant dense<0.000000e+00> : vector<8xf32>
    %60 = vector.multi_reduction <add>, %55, %cst_44 [1] : vector<8x32xf32> to vector<8xf32>
    %61 = vector.shape_cast %60 : vector<8xf32> to vector<8x1xf32>
    %cst_45 = arith.constant 3.200000e+01 : f32
    %62 = vector.broadcast %cst_45 : f32 to vector<8x1xf32>
    %63 = arith.divf %61, %62 : vector<8x1xf32>
    %64 = vector.broadcast %63 : vector<8x1xf32> to vector<8x32xf32>
    %65 = arith.subf %55, %64 : vector<8x32xf32>
    %66 = arith.mulf %65, %65 : vector<8x32xf32>
    %cst_46 = arith.constant dense<0.000000e+00> : vector<8xf32>
    %67 = vector.multi_reduction <add>, %66, %cst_46 [1] : vector<8x32xf32> to vector<8xf32>
    %68 = vector.shape_cast %67 : vector<8xf32> to vector<8x1xf32>
    %cst_47 = arith.constant 3.200000e+01 : f32
    %69 = vector.broadcast %cst_47 : f32 to vector<8x1xf32>
    %70 = arith.divf %68, %69 : vector<8x1xf32>
    %71 = vector.broadcast %63 : vector<8x1xf32> to vector<8x32xf32>
    %72 = arith.subf %55, %71 : vector<8x32xf32>
    %cst_48 = arith.constant 9.99999974E-6 : f32
    %73 = vector.broadcast %cst_48 : f32 to vector<8x1xf32>
    %74 = arith.addf %70, %73 : vector<8x1xf32>
    %75 = math.rsqrt %74 : vector<8x1xf32>
    %76 = vector.broadcast %75 : vector<8x1xf32> to vector<8x32xf32>
    %77 = arith.mulf %72, %76 : vector<8x32xf32>
    %78 = vector.broadcast %57 : vector<1x32xf32> to vector<8x32xf32>
    %79 = arith.mulf %77, %78 : vector<8x32xf32>
    %80 = vector.broadcast %59 : vector<1x32xf32> to vector<8x32xf32>
    %81 = arith.addf %79, %80 : vector<8x32xf32>
    %c1 = arith.constant 1 : index
    %c0_49 = arith.constant 0 : index
    %c0_50 = arith.constant 0 : index
    %82 = vector.load %arg4[%c1, %c0_49, %c0_50] : memref<2x32x32xf32, #tpu.memory_space<vmem>>, vector<1x32x32xf32>
    %83 = vector.shape_cast %82 : vector<1x32x32xf32> to vector<32x32xf32>
    %cst_51 = arith.constant dense<0.000000e+00> : vector<8x32xf32>
    %84 = tpu.matmul %81, %83, %cst_51 {dimension_numbers = #tpu.dot_dimension_numbers<[1], [0], [0], [1], [0, 0, 1, 1], [], []>} : vector<8x32xf32>, vector<32x32xf32>, vector<8x32xf32> -> vector<8x32xf32>
    %c1_52 = arith.constant 1 : index
    %c0_53 = arith.constant 0 : index
    %c0_54 = arith.constant 0 : index
    %85 = vector.load %arg5[%c1_52, %c0_53, %c0_54] : memref<2x1x32xf32, #tpu.memory_space<vmem>>, vector<1x1x32xf32>
    %86 = vector.shape_cast %85 : vector<1x1x32xf32> to vector<1x32xf32>
    %87 = vector.broadcast %86 : vector<1x32xf32> to vector<8x32xf32>
    %88 = arith.addf %84, %87 : vector<8x32xf32>
    %c1_55 = arith.constant 1 : index
    %c0_56 = arith.constant 0 : index
    %c0_57 = arith.constant 0 : index
    %89 = vector.load %arg10[%c1_55, %c0_56, %c0_57] : memref<2x1x32xf32, #tpu.memory_space<vmem>>, vector<1x1x32xf32>
    %90 = vector.shape_cast %89 : vector<1x1x32xf32> to vector<1x32xf32>
    %c1_58 = arith.constant 1 : index
    %c0_59 = arith.constant 0 : index
    %c0_60 = arith.constant 0 : index
    %91 = vector.load %arg11[%c1_58, %c0_59, %c0_60] : memref<2x1x32xf32, #tpu.memory_space<vmem>>, vector<1x1x32xf32>
    %92 = vector.shape_cast %91 : vector<1x1x32xf32> to vector<1x32xf32>
    %cst_61 = arith.constant dense<0.000000e+00> : vector<8xf32>
    %93 = vector.multi_reduction <add>, %88, %cst_61 [1] : vector<8x32xf32> to vector<8xf32>
    %94 = vector.shape_cast %93 : vector<8xf32> to vector<8x1xf32>
    %cst_62 = arith.constant 3.200000e+01 : f32
    %95 = vector.broadcast %cst_62 : f32 to vector<8x1xf32>
    %96 = arith.divf %94, %95 : vector<8x1xf32>
    %97 = vector.broadcast %96 : vector<8x1xf32> to vector<8x32xf32>
    %98 = arith.subf %88, %97 : vector<8x32xf32>
    %99 = arith.mulf %98, %98 : vector<8x32xf32>
    %cst_63 = arith.constant dense<0.000000e+00> : vector<8xf32>
    %100 = vector.multi_reduction <add>, %99, %cst_63 [1] : vector<8x32xf32> to vector<8xf32>
    %101 = vector.shape_cast %100 : vector<8xf32> to vector<8x1xf32>
    %cst_64 = arith.constant 3.200000e+01 : f32
    %102 = vector.broadcast %cst_64 : f32 to vector<8x1xf32>
    %103 = arith.divf %101, %102 : vector<8x1xf32>
    %104 = vector.broadcast %96 : vector<8x1xf32> to vector<8x32xf32>
    %105 = arith.subf %88, %104 : vector<8x32xf32>
    %cst_65 = arith.constant 9.99999974E-6 : f32
    %106 = vector.broadcast %cst_65 : f32 to vector<8x1xf32>
    %107 = arith.addf %103, %106 : vector<8x1xf32>
    %108 = math.rsqrt %107 : vector<8x1xf32>
    %109 = vector.broadcast %108 : vector<8x1xf32> to vector<8x32xf32>
    %110 = arith.mulf %105, %109 : vector<8x32xf32>
    %111 = vector.broadcast %90 : vector<1x32xf32> to vector<8x32xf32>
    %112 = arith.mulf %110, %111 : vector<8x32xf32>
    %113 = vector.broadcast %92 : vector<1x32xf32> to vector<8x32xf32>
    %114 = arith.addf %112, %113 : vector<8x32xf32>
    %c1_66 = arith.constant 1 : index
    %c0_67 = arith.constant 0 : index
    %c0_68 = arith.constant 0 : index
    %115 = vector.load %arg6[%c1_66, %c0_67, %c0_68] : memref<2x32x2048xf32, #tpu.memory_space<vmem>>, vector<1x32x2048xf32>
    %116 = vector.shape_cast %115 : vector<1x32x2048xf32> to vector<32x2048xf32>
    %cst_69 = arith.constant dense<0.000000e+00> : vector<8x2048xf32>
    %117 = tpu.matmul %114, %116, %cst_69 {dimension_numbers = #tpu.dot_dimension_numbers<[1], [0], [0], [1], [0, 0, 1, 1], [], []>} : vector<8x32xf32>, vector<32x2048xf32>, vector<8x2048xf32> -> vector<8x2048xf32>
    %c1_70 = arith.constant 1 : index
    %c0_71 = arith.constant 0 : index
    %c0_72 = arith.constant 0 : index
    %118 = vector.load %arg7[%c1_70, %c0_71, %c0_72] : memref<2x1x2048xf32, #tpu.memory_space<vmem>>, vector<1x1x2048xf32>
    %119 = vector.shape_cast %118 : vector<1x1x2048xf32> to vector<1x2048xf32>
    %120 = vector.broadcast %119 : vector<1x2048xf32> to vector<8x2048xf32>
    %121 = arith.addf %117, %120 : vector<8x2048xf32>
    %cst_73 = arith.constant 0.000000e+00 : f32
    %122 = vector.broadcast %cst_73 : f32 to vector<8x2048xf32>
    %123 = arith.maximumf %121, %122 : vector<8x2048xf32>
    %c1_74 = arith.constant 1 : index
    %c0_75 = arith.constant 0 : index
    %c0_76 = arith.constant 0 : index
    %124 = vector.load %arg8[%c1_74, %c0_75, %c0_76] : memref<2x2048x32xf32, #tpu.memory_space<vmem>>, vector<1x2048x32xf32>
    %125 = vector.shape_cast %124 : vector<1x2048x32xf32> to vector<2048x32xf32>
    %cst_77 = arith.constant dense<0.000000e+00> : vector<8x32xf32>
    %126 = tpu.matmul %123, %125, %cst_77 {dimension_numbers = #tpu.dot_dimension_numbers<[1], [0], [0], [1], [0, 0, 1, 1], [], []>} : vector<8x2048xf32>, vector<2048x32xf32>, vector<8x32xf32> -> vector<8x32xf32>
    %c1_78 = arith.constant 1 : index
    %c0_79 = arith.constant 0 : index
    %c0_80 = arith.constant 0 : index
    %127 = vector.load %arg9[%c1_78, %c0_79, %c0_80] : memref<2x1x32xf32, #tpu.memory_space<vmem>>, vector<1x1x32xf32>
    %128 = vector.shape_cast %127 : vector<1x1x32xf32> to vector<1x32xf32>
    %129 = vector.broadcast %128 : vector<1x32xf32> to vector<8x32xf32>
    %130 = arith.addf %126, %129 : vector<8x32xf32>
    %131 = arith.addf %114, %130 : vector<8x32xf32>
    %c1_81 = arith.constant 1 : index
    %c0_82 = arith.constant 0 : index
    %c0_83 = arith.constant 0 : index
    %132 = vector.load %arg12[%c1_81, %c0_82, %c0_83] : memref<2x1x32xf32, #tpu.memory_space<vmem>>, vector<1x1x32xf32>
    %133 = vector.shape_cast %132 : vector<1x1x32xf32> to vector<1x32xf32>
    %c1_84 = arith.constant 1 : index
    %c0_85 = arith.constant 0 : index
    %c0_86 = arith.constant 0 : index
    %134 = vector.load %arg13[%c1_84, %c0_85, %c0_86] : memref<2x1x32xf32, #tpu.memory_space<vmem>>, vector<1x1x32xf32>
    %135 = vector.shape_cast %134 : vector<1x1x32xf32> to vector<1x32xf32>
    %cst_87 = arith.constant dense<0.000000e+00> : vector<8xf32>
    %136 = vector.multi_reduction <add>, %131, %cst_87 [1] : vector<8x32xf32> to vector<8xf32>
    %137 = vector.shape_cast %136 : vector<8xf32> to vector<8x1xf32>
    %cst_88 = arith.constant 3.200000e+01 : f32
    %138 = vector.broadcast %cst_88 : f32 to vector<8x1xf32>
    %139 = arith.divf %137, %138 : vector<8x1xf32>
    %140 = vector.broadcast %139 : vector<8x1xf32> to vector<8x32xf32>
    %141 = arith.subf %131, %140 : vector<8x32xf32>
    %142 = arith.mulf %141, %141 : vector<8x32xf32>
    %cst_89 = arith.constant dense<0.000000e+00> : vector<8xf32>
    %143 = vector.multi_reduction <add>, %142, %cst_89 [1] : vector<8x32xf32> to vector<8xf32>
    %144 = vector.shape_cast %143 : vector<8xf32> to vector<8x1xf32>
    %cst_90 = arith.constant 3.200000e+01 : f32
    %145 = vector.broadcast %cst_90 : f32 to vector<8x1xf32>
    %146 = arith.divf %144, %145 : vector<8x1xf32>
    %147 = vector.broadcast %139 : vector<8x1xf32> to vector<8x32xf32>
    %148 = arith.subf %131, %147 : vector<8x32xf32>
    %cst_91 = arith.constant 9.99999974E-6 : f32
    %149 = vector.broadcast %cst_91 : f32 to vector<8x1xf32>
    %150 = arith.addf %146, %149 : vector<8x1xf32>
    %151 = math.rsqrt %150 : vector<8x1xf32>
    %152 = vector.broadcast %151 : vector<8x1xf32> to vector<8x32xf32>
    %153 = arith.mulf %148, %152 : vector<8x32xf32>
    %154 = vector.broadcast %133 : vector<1x32xf32> to vector<8x32xf32>
    %155 = arith.mulf %153, %154 : vector<8x32xf32>
    %156 = vector.broadcast %135 : vector<1x32xf32> to vector<8x32xf32>
    %157 = arith.addf %155, %156 : vector<8x32xf32>
    %c0_92 = arith.constant 0 : index
    %c0_93 = arith.constant 0 : index
    %158 = vector.load %arg14[%c0_92, %c0_93] : memref<1x32xf32, #tpu.memory_space<vmem>>, vector<1x32xf32>
    %159 = vector.broadcast %158 : vector<1x32xf32> to vector<8x32xf32>
    %160 = arith.mulf %157, %159 : vector<8x32xf32>
    %cst_94 = arith.constant dense<0.000000e+00> : vector<8xf32>
    %161 = vector.multi_reduction <add>, %160, %cst_94 [1] : vector<8x32xf32> to vector<8xf32>
    %162 = vector.shape_cast %161 : vector<8xf32> to vector<8x1xf32>
    %c0_95 = arith.constant 0 : index
    %c0_96 = arith.constant 0 : index
    %163 = vector.load %arg15[%c0_95, %c0_96] : memref<1x1xf32, #tpu.memory_space<vmem>>, vector<1x1xf32>
    %164 = vector.broadcast %163 : vector<1x1xf32> to vector<8x1xf32>
    %165 = arith.addf %162, %164 : vector<8x1xf32>
    %c0_97 = arith.constant 0 : index
    %c0_98 = arith.constant 0 : index
    %166 = vector.load %arg16[%c0_97, %c0_98] : memref<8x1xf32, #tpu.memory_space<vmem>>, vector<8x1xf32>
    tpu.vector_store %arg16[%c0_97, %c0_98], %165 {strides = array<i32>} : memref<8x1xf32, #tpu.memory_space<vmem>>, vector<8x1xf32>,
    return
  }
  func.func @transform_0(%arg0: i32) -> (i32, i32) {
    %c0_i32 = arith.constant 0 : i32
    %c0_i32_0 = arith.constant 0 : i32
    return %arg0, %c0_i32 : i32, i32
  }
  func.func @transform_1(%arg0: i32) -> (i32, i32) {
    %c0_i32 = arith.constant 0 : i32
    %c0_i32_0 = arith.constant 0 : i32
    %c0_i32_1 = arith.constant 0 : i32
    return %c0_i32, %c0_i32_0 : i32, i32
  }
  func.func @transform_2(%arg0: i32) -> (i32, i32) {
    %c0_i32 = arith.constant 0 : i32
    %c0_i32_0 = arith.constant 0 : i32
    %c0_i32_1 = arith.constant 0 : i32
    return %c0_i32, %c0_i32_0 : i32, i32
  }
  func.func @transform_3(%arg0: i32) -> (i32, i32, i32) {
    %c0_i32 = arith.constant 0 : i32
    %c0_i32_0 = arith.constant 0 : i32
    %c0_i32_1 = arith.constant 0 : i32
    %c0_i32_2 = arith.constant 0 : i32
    return %c0_i32, %c0_i32_0, %c0_i32_1 : i32, i32, i32
  }
  func.func @transform_4(%arg0: i32) -> (i32, i32, i32) {
    %c0_i32 = arith.constant 0 : i32
    %c0_i32_0 = arith.constant 0 : i32
    %c0_i32_1 = arith.constant 0 : i32
    %c0_i32_2 = arith.constant 0 : i32
    return %c0_i32, %c0_i32_0, %c0_i32_1 : i32, i32, i32
  }
  func.func @transform_5(%arg0: i32) -> (i32, i32, i32) {
    %c0_i32 = arith.constant 0 : i32
    %c0_i32_0 = arith.constant 0 : i32
    %c0_i32_1 = arith.constant 0 : i32
    %c0_i32_2 = arith.constant 0 : i32
    return %c0_i32, %c0_i32_0, %c0_i32_1 : i32, i32, i32
  }
  func.func @transform_6(%arg0: i32) -> (i32, i32, i32) {
    %c0_i32 = arith.constant 0 : i32
    %c0_i32_0 = arith.constant 0 : i32
    %c0_i32_1 = arith.constant 0 : i32
    %c0_i32_2 = arith.constant 0 : i32
    return %c0_i32, %c0_i32_0, %c0_i32_1 : i32, i32, i32
  }
  func.func @transform_7(%arg0: i32) -> (i32, i32, i32) {
    %c0_i32 = arith.constant 0 : i32
    %c0_i32_0 = arith.constant 0 : i32
    %c0_i32_1 = arith.constant 0 : i32
    %c0_i32_2 = arith.constant 0 : i32
    return %c0_i32, %c0_i32_0, %c0_i32_1 : i32, i32, i32
  }
  func.func @transform_8(%arg0: i32) -> (i32, i32, i32) {
    %c0_i32 = arith.constant 0 : i32
    %c0_i32_0 = arith.constant 0 : i32
    %c0_i32_1 = arith.constant 0 : i32
    %c0_i32_2 = arith.constant 0 : i32
    return %c0_i32, %c0_i32_0, %c0_i32_1 : i32, i32, i32
  }
  func.func @transform_9(%arg0: i32) -> (i32, i32, i32) {
    %c0_i32 = arith.constant 0 : i32
    %c0_i32_0 = arith.constant 0 : i32
    %c0_i32_1 = arith.constant 0 : i32
    %c0_i32_2 = arith.constant 0 : i32
    return %c0_i32, %c0_i32_0, %c0_i32_1 : i32, i32, i32
  }
  func.func @transform_10(%arg0: i32) -> (i32, i32, i32) {
    %c0_i32 = arith.constant 0 : i32
    %c0_i32_0 = arith.constant 0 : i32
    %c0_i32_1 = arith.constant 0 : i32
    %c0_i32_2 = arith.constant 0 : i32
    return %c0_i32, %c0_i32_0, %c0_i32_1 : i32, i32, i32
  }
  func.func @transform_11(%arg0: i32) -> (i32, i32, i32) {
    %c0_i32 = arith.constant 0 : i32
    %c0_i32_0 = arith.constant 0 : i32
    %c0_i32_1 = arith.constant 0 : i32
    %c0_i32_2 = arith.constant 0 : i32
    return %c0_i32, %c0_i32_0, %c0_i32_1 : i32, i32, i32
  }
  func.func @transform_12(%arg0: i32) -> (i32, i32, i32) {
    %c0_i32 = arith.constant 0 : i32
    %c0_i32_0 = arith.constant 0 : i32
    %c0_i32_1 = arith.constant 0 : i32
    %c0_i32_2 = arith.constant 0 : i32
    return %c0_i32, %c0_i32_0, %c0_i32_1 : i32, i32, i32
  }
  func.func @transform_13(%arg0: i32) -> (i32, i32) {
    %c0_i32 = arith.constant 0 : i32
    %c0_i32_0 = arith.constant 0 : i32
    %c0_i32_1 = arith.constant 0 : i32
    return %c0_i32, %c0_i32_0 : i32, i32
  }
  func.func @transform_14(%arg0: i32) -> (i32, i32) {
    %c0_i32 = arith.constant 0 : i32
    %c0_i32_0 = arith.constant 0 : i32
    %c0_i32_1 = arith.constant 0 : i32
    return %c0_i32, %c0_i32_0 : i32, i32
  }
  func.func @transform_15(%arg0: i32) -> (i32, i32) {
    %c0_i32 = arith.constant 0 : i32
    %c0_i32_0 = arith.constant 0 : i32
    return %arg0, %c0_i32 : i32, i32
  }
}

</mosaic_0001>

<llo_original>
// kernel: tpu_custom_call.1
$region0: #{tpu_custom_call.1}
  #allocation0 [shape = 'u32[]', space=smem, size = 0x4, offset = 0x4, fixed_abs, tag = 'smem constant byte address 0x4 - core index']
  #allocation1 [shape = 'u32[72,128]{1,0:T(1,128)}', space=vmem, size = 0x9000, scoped, tag = 'internal scratch']
  #allocation2 [shape = 'f32[1,1]{1,0:T(1,128)S(1)}', space=vmem, size = 0x200, scoped, tag = 'scoped memory for tpu_custom_call.1']
  %s0 = inlined_call_operand.vmem [shape: f32[8,128], index: 0, kind: input, shape index: {}]
  %s1 = inlined_call_operand.vmem [shape: f32[128,32], index: 1, kind: input, shape index: {}]
  %s2 = inlined_call_operand.vmem [shape: f32[1,32], index: 2, kind: input, shape index: {}]
  %s3 = inlined_call_operand.vmem [shape: f32[2,32,32], index: 3, kind: input, shape index: {}]
  %s4 = inlined_call_operand.vmem [shape: f32[2,1,32], index: 4, kind: input, shape index: {}]
  %s5 = inlined_call_operand.vmem [shape: f32[2,32,2048], index: 5, kind: input, shape index: {}]
  %s6 = inlined_call_operand.vmem [shape: f32[2,1,2048], index: 6, kind: input, shape index: {}]
  %s7 = inlined_call_operand.vmem [shape: f32[2,2048,32], index: 7, kind: input, shape index: {}]
  %s8 = inlined_call_operand.vmem [shape: f32[2,1,32], index: 8, kind: input, shape index: {}]
  %s9 = inlined_call_operand.vmem [shape: f32[2,1,32], index: 9, kind: input, shape index: {}]
  %s10 = inlined_call_operand.vmem [shape: f32[2,1,32], index: 10, kind: input, shape index: {}]
  %s11 = inlined_call_operand.vmem [shape: f32[2,1,32], index: 11, kind: input, shape index: {}]
  %s12 = inlined_call_operand.vmem [shape: f32[2,1,32], index: 12, kind: input, shape index: {}]
  %s13 = inlined_call_operand.vmem [shape: f32[1,32], index: 13, kind: input, shape index: {}]
  %s14 = inlined_call_operand.<no memory space> [shape: f32[1,1], index: 14, kind: input, shape index: {}]
  %s15 = inlined_call_operand.vmem [shape: f32[8,1], index: 15, kind: output, shape index: {}]
  %s16 = sld [smem:[#allocation0]]
  $region70: #{tpu_custom_call.1} parent=0
    _
  %s18 = ssub.s32 1, %s16
  %s19 = scalar_select 0, %s18, %s16
  %v20 = vstv %s14
  %21 = vst [vmem:[#allocation2] sm:$0x1] %v20
  // Predicated region
  $region2: #{tpu_custom_call.1} parent=0 // pred_check
    _
  $region3: #{tpu_custom_call.1} parent=0 // pred_check_branch
    %23 = sbr.rel (0) target = $region5
  $region4: #{tpu_custom_call.1} parent=0 // pred_region
    _
  $region5: #{tpu_custom_call.1} parent=0 // pred_fallthru
    _
  // Predicated region
  $region6: #{tpu_custom_call.1} parent=0 // pred_check
    _
  $region7: #{tpu_custom_call.1} parent=0 // pred_check_branch
    %25 = sbr.rel (0) target = $region9
  $region8: #{tpu_custom_call.1} parent=0 // pred_region
    _
  $region9: #{tpu_custom_call.1} parent=0 // pred_fallthru
    _
  // Predicated region
  $region10: #{tpu_custom_call.1} parent=0 // pred_check
    _
  $region11: #{tpu_custom_call.1} parent=0 // pred_check_branch
    %27 = sbr.rel (0) target = $region13
  $region12: #{tpu_custom_call.1} parent=0 // pred_region
    _
  $region13: #{tpu_custom_call.1} parent=0 // pred_fallthru
    _
  // Predicated region
  $region14: #{tpu_custom_call.1} parent=0 // pred_check
    _
  $region15: #{tpu_custom_call.1} parent=0 // pred_check_branch
    %29 = sbr.rel (0) target = $region17
  $region16: #{tpu_custom_call.1} parent=0 // pred_region
    _
  $region17: #{tpu_custom_call.1} parent=0 // pred_fallthru
    _
  // Predicated region
  $region18: #{tpu_custom_call.1} parent=0 // pred_check
    _
  $region19: #{tpu_custom_call.1} parent=0 // pred_check_branch
    %31 = sbr.rel (0) target = $region21
  $region20: #{tpu_custom_call.1} parent=0 // pred_region
    _
  $region21: #{tpu_custom_call.1} parent=0 // pred_fallthru
    _
  // Predicated region
  $region22: #{tpu_custom_call.1} parent=0 // pred_check
    _
  $region23: #{tpu_custom_call.1} parent=0 // pred_check_branch
    %33 = sbr.rel (0) target = $region25
  $region24: #{tpu_custom_call.1} parent=0 // pred_region
    _
  $region25: #{tpu_custom_call.1} parent=0 // pred_fallthru
    _
  // Predicated region
  $region26: #{tpu_custom_call.1} parent=0 // pred_check
    _
  $region27: #{tpu_custom_call.1} parent=0 // pred_check_branch
    %35 = sbr.rel (0) target = $region29
  $region28: #{tpu_custom_call.1} parent=0 // pred_region
    _
  $region29: #{tpu_custom_call.1} parent=0 // pred_fallthru
    _
  // Predicated region
  $region30: #{tpu_custom_call.1} parent=0 // pred_check
    _
  $region31: #{tpu_custom_call.1} parent=0 // pred_check_branch
    %37 = sbr.rel (0) target = $region33
  $region32: #{tpu_custom_call.1} parent=0 // pred_region
    _
  $region33: #{tpu_custom_call.1} parent=0 // pred_fallthru
    _
  // Predicated region
  $region34: #{tpu_custom_call.1} parent=0 // pred_check
    _
  $region35: #{tpu_custom_call.1} parent=0 // pred_check_branch
    %39 = sbr.rel (0) target = $region37
  $region36: #{tpu_custom_call.1} parent=0 // pred_region
    _
  $region37: #{tpu_custom_call.1} parent=0 // pred_fallthru
    _
  // Predicated region
  $region38: #{tpu_custom_call.1} parent=0 // pred_check
    _
  $region39: #{tpu_custom_call.1} parent=0 // pred_check_branch
    %41 = sbr.rel (0) target = $region41
  $region40: #{tpu_custom_call.1} parent=0 // pred_region
    _
  $region41: #{tpu_custom_call.1} parent=0 // pred_fallthru
    _
  // Predicated region
  $region42: #{tpu_custom_call.1} parent=0 // pred_check
    _
  $region43: #{tpu_custom_call.1} parent=0 // pred_check_branch
    %43 = sbr.rel (0) target = $region45
  $region44: #{tpu_custom_call.1} parent=0 // pred_region
    _
  $region45: #{tpu_custom_call.1} parent=0 // pred_fallthru
    _
  // Predicated region
  $region46: #{tpu_custom_call.1} parent=0 // pred_check
    _
  $region47: #{tpu_custom_call.1} parent=0 // pred_check_branch
    %45 = sbr.rel (0) target = $region49
  $region48: #{tpu_custom_call.1} parent=0 // pred_region
    _
  $region49: #{tpu_custom_call.1} parent=0 // pred_fallthru
    _
  // Predicated region
  $region50: #{tpu_custom_call.1} parent=0 // pred_check
    _
  $region51: #{tpu_custom_call.1} parent=0 // pred_check_branch
    %47 = sbr.rel (0) target = $region53
  $region52: #{tpu_custom_call.1} parent=0 // pred_region
    _
  $region53: #{tpu_custom_call.1} parent=0 // pred_fallthru
    _
  // Predicated region
  $region54: #{tpu_custom_call.1} parent=0 // pred_check
    _
  $region55: #{tpu_custom_call.1} parent=0 // pred_check_branch
    %49 = sbr.rel (0) target = $region57
  $region56: #{tpu_custom_call.1} parent=0 // pred_region
    _
  $region57: #{tpu_custom_call.1} parent=0 // pred_fallthru
    _
  // Predicated region
  $region58: #{tpu_custom_call.1} parent=0 // pred_check
    _
  $region59: #{tpu_custom_call.1} parent=0 // pred_check_branch
    %51 = sbr.rel (0) target = $region61
  $region60: #{tpu_custom_call.1} parent=0 // pred_region
    _
  $region61: #{tpu_custom_call.1} parent=0 // pred_fallthru
    _
  %v52 = vld [vmem:[%s0] sm:$0xff]
  %v53 = vld [vmem:[%s1] sm:$0xff]
  %v54 = vld [vmem:[%s1 + $0x8] sm:$0xff]
  %v55 = vld [vmem:[%s1 + $0x10] sm:$0xff]
  %v56 = vld [vmem:[%s1 + $0x18] sm:$0xff]
  %v57 = vld [vmem:[%s1 + $0x20] sm:$0xff]
  %v58 = vld [vmem:[%s1 + $0x28] sm:$0xff]
  %v59 = vld [vmem:[%s1 + $0x30] sm:$0xff]
  %v60 = vld [vmem:[%s1 + $0x38] sm:$0xff]
  %v61 = vld [vmem:[%s1 + $0x40] sm:$0xff]
  %v62 = vld [vmem:[%s1 + $0x48] sm:$0xff]
  %v63 = vld [vmem:[%s1 + $0x50] sm:$0xff]
  %v64 = vld [vmem:[%s1 + $0x58] sm:$0xff]
  %v65 = vld [vmem:[%s1 + $0x60] sm:$0xff]
  %v66 = vld [vmem:[%s1 + $0x68] sm:$0xff]
  %v67 = vld [vmem:[%s1 + $0x70] sm:$0xff]
  %v68 = vld [vmem:[%s1 + $0x78] sm:$0xff]
  %v69 = vld [vmem:[%s2] sm:$0x1]
  %v71 = vperm.slane %v69, 0
  %73 = vmatpush.msra.mxu0 %v68
  %74 = vmatpush.msra.mxu0 %v67
  %75 = vmatpush.msra.mxu0 %v66
  %76 = vmatpush.msra.mxu0 %v65
  %77 = vmatpush.msra.mxu0 %v64
  %78 = vmatpush.msra.mxu0 %v63
  %79 = vmatpush.msra.mxu0 %v62
  %80 = vmatpush.msra.mxu0 %v61
  %81 = vmatpush.msra.mxu0 %v60
  %82 = vmatpush.msra.mxu0 %v59
  %83 = vmatpush.msra.mxu0 %v58
  %84 = vmatpush.msra.mxu0 %v57
  %85 = vmatpush.msra.mxu0 %v56
  %86 = vmatpush.msra.mxu0 %v55
  %87 = vmatpush.msra.mxu0 %v54
  %88 = vmatpush.msra.mxu0 %v53
  %89 = vmatmul.f32.gmra.mxu0 %v52
  %v90 = vpop.f32.mrf.mxu0
  %v91 = vadd.f32 %v71, %v90
  %92 = vdwg.mxu0
  %v93 = vld [vmem:[%s3] sm:$0xff]
  %v94 = vld [vmem:[%s3 + $0x8] sm:$0xff]
  %v95 = vld [vmem:[%s3 + $0x10] sm:$0xff]
  %v96 = vld [vmem:[%s3 + $0x18] sm:$0xff]
  %v97 = vld [vmem:[%s4] sm:$0x1]
  %v99 = vperm.slane %v97, 0
  %vm101 = vcmask 261120
  %v103 = vsel %vm101, %v91, 0
  %105 = vmatpush.msra.mxu0 0.0
  %106 = vmatpush.msra.mxu0 0.0
  %107 = vmatpush.msra.mxu0 0.0
  %108 = vmatpush.msra.mxu0 0.0
  %109 = vmatpush.msra.mxu0 0.0
  %110 = vmatpush.msra.mxu0 0.0
  %111 = vmatpush.msra.mxu0 0.0
  %112 = vmatpush.msra.mxu0 0.0
  %113 = vmatpush.msra.mxu0 0.0
  %114 = vmatpush.msra.mxu0 0.0
  %115 = vmatpush.msra.mxu0 0.0
  %116 = vmatpush.msra.mxu0 0.0
  %117 = vmatpush.msra.mxu0 %v96
  %118 = vmatpush.msra.mxu0 %v95
  %119 = vmatpush.msra.mxu0 %v94
  %120 = vmatpush.msra.mxu0 %v93
  %121 = vmatmul.f32.gmra.mxu0 %v103
  %v122 = vpop.f32.mrf.mxu0
  %v123 = vadd.f32 %v99, %v122
  %124 = vdwg.mxu0
  %v125 = vld [vmem:[%s9] sm:$0x1]
  %v126 = vld [vmem:[%s10] sm:$0x1]
  %v127 = vsel %vm101, %v123, 0.0
  %128 = vadd.xlane.f32.xlu0 %v127
  %v129 = vpop.xlane.xlu0 %128
  %v130 = vrcp.pop 32.0
  %v131 = vmul.f32 32.0, %v130
  %v132 = vsub.f32 1.0, %v131
  %v133 = vmul.f32 %v130, %v132
  %v134 = vadd.f32 %v130, %v133
  %vm135 = vweird.f32 %v130
  %v136 = vsel %vm135, %v130, %v134
  %v137 = vmul.f32 %v129, %v136
  %v138 = vsub.f32 %v123, %v137
  %v139 = vmul.f32 %v138, %v138
  %v140 = vsel %vm101, %v139, 0.0
  %141 = vadd.xlane.f32.xlu0 %v140
  %v142 = vpop.xlane.xlu0 %141
  %v143 = vmul.f32 %v142, %v136
  %v144 = vadd.f32 %v143, 1e-05
  %v145 = vrsqrt.pop %v144
  %v146 = vmul.f32 %v145, %v144
  %v147 = vmul.f32 %v146, %v145
  %v148 = vmul.f32 0.5, %v147
  %v149 = vsub.f32 1.5, %v148
  %v150 = vmul.f32 %v145, %v149
  %vm151 = vweird.f32 %v144
  %vm152 = vweird.f32 %v145
  %vm153 = vmor %vm151, %vm152
  %v154 = vsel %vm153, %v145, %v150
  %v155 = vmul.f32 %v138, %v154
  %v157 = vperm.slane %v125, 0
  %v159 = vmul.f32 %v155, %v157
  %v161 = vperm.slane %v126, 0
  %v163 = vadd.f32 %v159, %v161
  %v164 = vld [vmem:[%s5] sm:$0xff]
  %v165 = vld [vmem:[%s5 + $0x8] sm:$0xff]
  %v166 = vld [vmem:[%s5 + $0x10] sm:$0xff]
  %v167 = vld [vmem:[%s5 + $0x18] sm:$0xff]
  %v168 = vld [vmem:[%s5 + $0x20] sm:$0xff]
  %v169 = vld [vmem:[%s5 + $0x28] sm:$0xff]
  %v170 = vld [vmem:[%s5 + $0x30] sm:$0xff]
  %v171 = vld [vmem:[%s5 + $0x38] sm:$0xff]
  %v172 = vld [vmem:[%s5 + $0x40] sm:$0xff]
  %v173 = vld [vmem:[%s5 + $0x48] sm:$0xff]
  %v174 = vld [vmem:[%s5 + $0x50] sm:$0xff]
  %v175 = vld [vmem:[%s5 + $0x58] sm:$0xff]
  %v176 = vld [vmem:[%s5 + $0x60] sm:$0xff]
  %v177 = vld [vmem:[%s5 + $0x68] sm:$0xff]
  %v178 = vld [vmem:[%s5 + $0x70] sm:$0xff]
  %v179 = vld [vmem:[%s5 + $0x78] sm:$0xff]
  %v180 = vld [vmem:[%s5 + $0x80] sm:$0xff]
  %v181 = vld [vmem:[%s5 + $0x88] sm:$0xff]
  %v182 = vld [vmem:[%s5 + $0x90] sm:$0xff]
  %v183 = vld [vmem:[%s5 + $0x98] sm:$0xff]
  %v184 = vld [vmem:[%s5 + $0xa0] sm:$0xff]
  %v185 = vld [vmem:[%s5 + $0xa8] sm:$0xff]
  %v186 = vld [vmem:[%s5 + $0xb0] sm:$0xff]
  %v187 = vld [vmem:[%s5 + $0xb8] sm:$0xff]
  %v188 = vld [vmem:[%s5 + $0xc0] sm:$0xff]
  %v189 = vld [vmem:[%s5 + $0xc8] sm:$0xff]
  %v190 = vld [vmem:[%s5 + $0xd0] sm:$0xff]
  %v191 = vld [vmem:[%s5 + $0xd8] sm:$0xff]
  %v192 = vld [vmem:[%s5 + $0xe0] sm:$0xff]
  %v193 = vld [vmem:[%s5 + $0xe8] sm:$0xff]
  %v194 = vld [vmem:[%s5 + $0xf0] sm:$0xff]
  %v195 = vld [vmem:[%s5 + $0xf8] sm:$0xff]
  %v196 = vld [vmem:[%s5 + $0x100] sm:$0xff]
  %v197 = vld [vmem:[%s5 + $0x108] sm:$0xff]
  %v198 = vld [vmem:[%s5 + $0x110] sm:$0xff]
  %v199 = vld [vmem:[%s5 + $0x118] sm:$0xff]
  %v200 = vld [vmem:[%s5 + $0x120] sm:$0xff]
  %v201 = vld [vmem:[%s5 + $0x128] sm:$0xff]
  %v202 = vld [vmem:[%s5 + $0x130] sm:$0xff]
  %v203 = vld [vmem:[%s5 + $0x138] sm:$0xff]
  %v204 = vld [vmem:[%s5 + $0x140] sm:$0xff]
  %v205 = vld [vmem:[%s5 + $0x148] sm:$0xff]
  %v206 = vld [vmem:[%s5 + $0x150] sm:$0xff]
  %v207 = vld [vmem:[%s5 + $0x158] sm:$0xff]
  %v208 = vld [vmem:[%s5 + $0x160] sm:$0xff]
  %v209 = vld [vmem:[%s5 + $0x168] sm:$0xff]
  %v210 = vld [vmem:[%s5 + $0x170] sm:$0xff]
  %v211 = vld [vmem:[%s5 + $0x178] sm:$0xff]
  %v212 = vld [vmem:[%s5 + $0x180] sm:$0xff]
  %v213 = vld [vmem:[%s5 + $0x188] sm:$0xff]
  %v214 = vld [vmem:[%s5 + $0x190] sm:$0xff]
  %v215 = vld [vmem:[%s5 + $0x198] sm:$0xff]
  %v216 = vld [vmem:[%s5 + $0x1a0] sm:$0xff]
  %v217 = vld [vmem:[%s5 + $0x1a8] sm:$0xff]
  %v218 = vld [vmem:[%s5 + $0x1b0] sm:$0xff]
  %v219 = vld [vmem:[%s5 + $0x1b8] sm:$0xff]
  %v220 = vld [vmem:[%s5 + $0x1c0] sm:$0xff]
  %v221 = vld [vmem:[%s5 + $0x1c8] sm:$0xff]
  %v222 = vld [vmem:[%s5 + $0x1d0] sm:$0xff]
  %v223 = vld [vmem:[%s5 + $0x1d8] sm:$0xff]
  %v224 = vld [vmem:[%s5 + $0x1e0] sm:$0xff]
  %v225 = vld [vmem:[%s5 + $0x1e8] sm:$0xff]
  %v226 = vld [vmem:[%s5 + $0x1f0] sm:$0xff]
  %v227 = vld [vmem:[%s5 + $0x1f8] sm:$0xff]
  %v228 = vld [vmem:[%s6] sm:$0xff]
  %v229 = vld [vmem:[%s6 + $0x8] sm:$0xff]
  %v232 = vperm.slane %v228, 0
  %v233 = vperm.slane %v228, 1
  %v234 = vperm.slane %v228, 2
  %v235 = vperm.slane %v228, 3
  %v236 = vperm.slane %v228, 4
  %v237 = vperm.slane %v228, 5
  %v238 = vperm.slane %v228, 6
  %v239 = vperm.slane %v228, 7
  %v240 = vperm.slane %v229, 0
  %v241 = vperm.slane %v229, 1
  %v242 = vperm.slane %v229, 2
  %v243 = vperm.slane %v229, 3
  %v244 = vperm.slane %v229, 4
  %v245 = vperm.slane %v229, 5
  %v246 = vperm.slane %v229, 6
  %v247 = vperm.slane %v229, 7
  %v265 = vsel %vm101, %v163, 0
  %267 = vmatpush.msra.mxu0 0.0
  %268 = vmatpush.msra.mxu0 0.0
  %269 = vmatpush.msra.mxu0 0.0
  %270 = vmatpush.msra.mxu0 0.0
  %271 = vmatpush.msra.mxu0 0.0
  %272 = vmatpush.msra.mxu0 0.0
  %273 = vmatpush.msra.mxu0 0.0
  %274 = vmatpush.msra.mxu0 0.0
  %275 = vmatpush.msra.mxu0 0.0
  %276 = vmatpush.msra.mxu0 0.0
  %277 = vmatpush.msra.mxu0 0.0
  %278 = vmatpush.msra.mxu0 0.0
  %279 = vmatpush.msra.mxu0 %v212
  %280 = vmatpush.msra.mxu0 %v196
  %281 = vmatpush.msra.mxu0 %v180
  %282 = vmatpush.msra.mxu0 %v164
  %283 = vmatmul.f32.gmra.mxu0 %v265
  %v284 = vpop.f32.mrf.mxu0
  %v285 = vadd.f32 %v232, %v284
  %286 = vdwg.mxu0
  %287 = vmatpush.msra.mxu0 0.0
  %288 = vmatpush.msra.mxu0 0.0
  %289 = vmatpush.msra.mxu0 0.0
  %290 = vmatpush.msra.mxu0 0.0
  %291 = vmatpush.msra.mxu0 0.0
  %292 = vmatpush.msra.mxu0 0.0
  %293 = vmatpush.msra.mxu0 0.0
  %294 = vmatpush.msra.mxu0 0.0
  %295 = vmatpush.msra.mxu0 0.0
  %296 = vmatpush.msra.mxu0 0.0
  %297 = vmatpush.msra.mxu0 0.0
  %298 = vmatpush.msra.mxu0 0.0
  %299 = vmatpush.msra.mxu0 %v213
  %300 = vmatpush.msra.mxu0 %v197
  %301 = vmatpush.msra.mxu0 %v181
  %302 = vmatpush.msra.mxu0 %v165
  %303 = vmatmul.f32.gmra.mxu0 %v265
  %v304 = vpop.f32.mrf.mxu0
  %v305 = vadd.f32 %v233, %v304
  %306 = vdwg.mxu0
  %307 = vmatpush.msra.mxu0 0.0
  %308 = vmatpush.msra.mxu0 0.0
  %309 = vmatpush.msra.mxu0 0.0
  %310 = vmatpush.msra.mxu0 0.0
  %311 = vmatpush.msra.mxu0 0.0
  %312 = vmatpush.msra.mxu0 0.0
  %313 = vmatpush.msra.mxu0 0.0
  %314 = vmatpush.msra.mxu0 0.0
  %315 = vmatpush.msra.mxu0 0.0
  %316 = vmatpush.msra.mxu0 0.0
  %317 = vmatpush.msra.mxu0 0.0
  %318 = vmatpush.msra.mxu0 0.0
  %319 = vmatpush.msra.mxu0 %v214
  %320 = vmatpush.msra.mxu0 %v198
  %321 = vmatpush.msra.mxu0 %v182
  %322 = vmatpush.msra.mxu0 %v166
  %323 = vmatmul.f32.gmra.mxu0 %v265
  %v324 = vpop.f32.mrf.mxu0
  %v325 = vadd.f32 %v234, %v324
  %326 = vdwg.mxu0
  %327 = vmatpush.msra.mxu0 0.0
  %328 = vmatpush.msra.mxu0 0.0
  %329 = vmatpush.msra.mxu0 0.0
  %330 = vmatpush.msra.mxu0 0.0
  %331 = vmatpush.msra.mxu0 0.0
  %332 = vmatpush.msra.mxu0 0.0
  %333 = vmatpush.msra.mxu0 0.0
  %334 = vmatpush.msra.mxu0 0.0
  %335 = vmatpush.msra.mxu0 0.0
  %336 = vmatpush.msra.mxu0 0.0
  %337 = vmatpush.msra.mxu0 0.0
  %338 = vmatpush.msra.mxu0 0.0
  %339 = vmatpush.msra.mxu0 %v215
  %340 = vmatpush.msra.mxu0 %v199
  %341 = vmatpush.msra.mxu0 %v183
  %342 = vmatpush.msra.mxu0 %v167
  %343 = vmatmul.f32.gmra.mxu0 %v265
  %v344 = vpop.f32.mrf.mxu0
  %v345 = vadd.f32 %v235, %v344
  %346 = vdwg.mxu0
  %347 = vmatpush.msra.mxu0 0.0
  %348 = vmatpush.msra.mxu0 0.0
  %349 = vmatpush.msra.mxu0 0.0
  %350 = vmatpush.msra.mxu0 0.0
  %351 = vmatpush.msra.mxu0 0.0
  %352 = vmatpush.msra.mxu0 0.0
  %353 = vmatpush.msra.mxu0 0.0
  %354 = vmatpush.msra.mxu0 0.0
  %355 = vmatpush.msra.mxu0 0.0
  %356 = vmatpush.msra.mxu0 0.0
  %357 = vmatpush.msra.mxu0 0.0
  %358 = vmatpush.msra.mxu0 0.0
  %359 = vmatpush.msra.mxu0 %v216
  %360 = vmatpush.msra.mxu0 %v200
  %361 = vmatpush.msra.mxu0 %v184
  %362 = vmatpush.msra.mxu0 %v168
  %363 = vmatmul.f32.gmra.mxu0 %v265
  %v364 = vpop.f32.mrf.mxu0
  %v365 = vadd.f32 %v236, %v364
  %366 = vdwg.mxu0
  %367 = vmatpush.msra.mxu0 0.0
  %368 = vmatpush.msra.mxu0 0.0
  %369 = vmatpush.msra.mxu0 0.0
  %370 = vmatpush.msra.mxu0 0.0
  %371 = vmatpush.msra.mxu0 0.0
  %372 = vmatpush.msra.mxu0 0.0
  %373 = vmatpush.msra.mxu0 0.0
  %374 = vmatpush.msra.mxu0 0.0
  %375 = vmatpush.msra.mxu0 0.0
  %376 = vmatpush.msra.mxu0 0.0
  %377 = vmatpush.msra.mxu0 0.0
  %378 = vmatpush.msra.mxu0 0.0
  %379 = vmatpush.msra.mxu0 %v217
  %380 = vmatpush.msra.mxu0 %v201
  %381 = vmatpush.msra.mxu0 %v185
  %382 = vmatpush.msra.mxu0 %v169
  %383 = vmatmul.f32.gmra.mxu0 %v265
  %v384 = vpop.f32.mrf.mxu0
  %v385 = vadd.f32 %v237, %v384
  %386 = vdwg.mxu0
  %387 = vmatpush.msra.mxu0 0.0
  %388 = vmatpush.msra.mxu0 0.0
  %389 = vmatpush.msra.mxu0 0.0
  %390 = vmatpush.msra.mxu0 0.0
  %391 = vmatpush.msra.mxu0 0.0
  %392 = vmatpush.msra.mxu0 0.0
  %393 = vmatpush.msra.mxu0 0.0
  %394 = vmatpush.msra.mxu0 0.0
  %395 = vmatpush.msra.mxu0 0.0
  %396 = vmatpush.msra.mxu0 0.0
  %397 = vmatpush.msra.mxu0 0.0
  %398 = vmatpush.msra.mxu0 0.0
  %399 = vmatpush.msra.mxu0 %v218
  %400 = vmatpush.msra.mxu0 %v202
  %401 = vmatpush.msra.mxu0 %v186
  %402 = vmatpush.msra.mxu0 %v170
  %403 = vmatmul.f32.gmra.mxu0 %v265
  %v404 = vpop.f32.mrf.mxu0
  %v405 = vadd.f32 %v238, %v404
  %406 = vdwg.mxu0
  %407 = vmatpush.msra.mxu0 0.0
  %408 = vmatpush.msra.mxu0 0.0
  %409 = vmatpush.msra.mxu0 0.0
  %410 = vmatpush.msra.mxu0 0.0
  %411 = vmatpush.msra.mxu0 0.0
  %412 = vmatpush.msra.mxu0 0.0
  %413 = vmatpush.msra.mxu0 0.0
  %414 = vmatpush.msra.mxu0 0.0
  %415 = vmatpush.msra.mxu0 0.0
  %416 = vmatpush.msra.mxu0 0.0
  %417 = vmatpush.msra.mxu0 0.0
  %418 = vmatpush.msra.mxu0 0.0
  %419 = vmatpush.msra.mxu0 %v219
  %420 = vmatpush.msra.mxu0 %v203
  %421 = vmatpush.msra.mxu0 %v187
  %422 = vmatpush.msra.mxu0 %v171
  %423 = vmatmul.f32.gmra.mxu0 %v265
  %v424 = vpop.f32.mrf.mxu0
  %v425 = vadd.f32 %v239, %v424
  %426 = vdwg.mxu0
  %427 = vmatpush.msra.mxu0 0.0
  %428 = vmatpush.msra.mxu0 0.0
  %429 = vmatpush.msra.mxu0 0.0
  %430 = vmatpush.msra.mxu0 0.0
  %431 = vmatpush.msra.mxu0 0.0
  %432 = vmatpush.msra.mxu0 0.0
  %433 = vmatpush.msra.mxu0 0.0
  %434 = vmatpush.msra.mxu0 0.0
  %435 = vmatpush.msra.mxu0 0.0
  %436 = vmatpush.msra.mxu0 0.0
  %437 = vmatpush.msra.mxu0 0.0
  %438 = vmatpush.msra.mxu0 0.0
  %439 = vmatpush.msra.mxu0 %v220
  %440 = vmatpush.msra.mxu0 %v204
  %441 = vmatpush.msra.mxu0 %v188
  %442 = vmatpush.msra.mxu0 %v172
  %443 = vmatmul.f32.gmra.mxu0 %v265
  %v444 = vpop.f32.mrf.mxu0
  %v445 = vadd.f32 %v240, %v444
  %446 = vdwg.mxu0
  %447 = vmatpush.msra.mxu0 0.0
  %448 = vmatpush.msra.mxu0 0.0
  %449 = vmatpush.msra.mxu0 0.0
  %450 = vmatpush.msra.mxu0 0.0
  %451 = vmatpush.msra.mxu0 0.0
  %452 = vmatpush.msra.mxu0 0.0
  %453 = vmatpush.msra.mxu0 0.0
  %454 = vmatpush.msra.mxu0 0.0
  %455 = vmatpush.msra.mxu0 0.0
  %456 = vmatpush.msra.mxu0 0.0
  %457 = vmatpush.msra.mxu0 0.0
  %458 = vmatpush.msra.mxu0 0.0
  %459 = vmatpush.msra.mxu0 %v221
  %460 = vmatpush.msra.mxu0 %v205
  %461 = vmatpush.msra.mxu0 %v189
  %462 = vmatpush.msra.mxu0 %v173
  %463 = vmatmul.f32.gmra.mxu0 %v265
  %v464 = vpop.f32.mrf.mxu0
  %v465 = vadd.f32 %v241, %v464
  %466 = vdwg.mxu0
  %467 = vmatpush.msra.mxu0 0.0
  %468 = vmatpush.msra.mxu0 0.0
  %469 = vmatpush.msra.mxu0 0.0
  %470 = vmatpush.msra.mxu0 0.0
  %471 = vmatpush.msra.mxu0 0.0
  %472 = vmatpush.msra.mxu0 0.0
  %473 = vmatpush.msra.mxu0 0.0
  %474 = vmatpush.msra.mxu0 0.0
  %475 = vmatpush.msra.mxu0 0.0
  %476 = vmatpush.msra.mxu0 0.0
  %477 = vmatpush.msra.mxu0 0.0
  %478 = vmatpush.msra.mxu0 0.0
  %479 = vmatpush.msra.mxu0 %v222
  %480 = vmatpush.msra.mxu0 %v206
  %481 = vmatpush.msra.mxu0 %v190
  %482 = vmatpush.msra.mxu0 %v174
  %483 = vmatmul.f32.gmra.mxu0 %v265
  %v484 = vpop.f32.mrf.mxu0
  %v485 = vadd.f32 %v242, %v484
  %486 = vdwg.mxu0
  %487 = vmatpush.msra.mxu0 0.0
  %488 = vmatpush.msra.mxu0 0.0
  %489 = vmatpush.msra.mxu0 0.0
  %490 = vmatpush.msra.mxu0 0.0
  %491 = vmatpush.msra.mxu0 0.0
  %492 = vmatpush.msra.mxu0 0.0
  %493 = vmatpush.msra.mxu0 0.0
  %494 = vmatpush.msra.mxu0 0.0
  %495 = vmatpush.msra.mxu0 0.0
  %496 = vmatpush.msra.mxu0 0.0
  %497 = vmatpush.msra.mxu0 0.0
  %498 = vmatpush.msra.mxu0 0.0
  %499 = vmatpush.msra.mxu0 %v223
  %500 = vmatpush.msra.mxu0 %v207
  %501 = vmatpush.msra.mxu0 %v191
  %502 = vmatpush.msra.mxu0 %v175
  %503 = vmatmul.f32.gmra.mxu0 %v265
  %v504 = vpop.f32.mrf.mxu0
  %v505 = vadd.f32 %v243, %v504
  %506 = vdwg.mxu0
  %507 = vmatpush.msra.mxu0 0.0
  %508 = vmatpush.msra.mxu0 0.0
  %509 = vmatpush.msra.mxu0 0.0
  %510 = vmatpush.msra.mxu0 0.0
  %511 = vmatpush.msra.mxu0 0.0
  %512 = vmatpush.msra.mxu0 0.0
  %513 = vmatpush.msra.mxu0 0.0
  %514 = vmatpush.msra.mxu0 0.0
  %515 = vmatpush.msra.mxu0 0.0
  %516 = vmatpush.msra.mxu0 0.0
  %517 = vmatpush.msra.mxu0 0.0
  %518 = vmatpush.msra.mxu0 0.0
  %519 = vmatpush.msra.mxu0 %v224
  %520 = vmatpush.msra.mxu0 %v208
  %521 = vmatpush.msra.mxu0 %v192
  %522 = vmatpush.msra.mxu0 %v176
  %523 = vmatmul.f32.gmra.mxu0 %v265
  %v524 = vpop.f32.mrf.mxu0
  %v525 = vadd.f32 %v244, %v524
  %526 = vdwg.mxu0
  %527 = vmatpush.msra.mxu0 0.0
  %528 = vmatpush.msra.mxu0 0.0
  %529 = vmatpush.msra.mxu0 0.0
  %530 = vmatpush.msra.mxu0 0.0
  %531 = vmatpush.msra.mxu0 0.0
  %532 = vmatpush.msra.mxu0 0.0
  %533 = vmatpush.msra.mxu0 0.0
  %534 = vmatpush.msra.mxu0 0.0
  %535 = vmatpush.msra.mxu0 0.0
  %536 = vmatpush.msra.mxu0 0.0
  %537 = vmatpush.msra.mxu0 0.0
  %538 = vmatpush.msra.mxu0 0.0
  %539 = vmatpush.msra.mxu0 %v225
  %540 = vmatpush.msra.mxu0 %v209
  %541 = vmatpush.msra.mxu0 %v193
  %542 = vmatpush.msra.mxu0 %v177
  %543 = vmatmul.f32.gmra.mxu0 %v265
  %v544 = vpop.f32.mrf.mxu0
  %v545 = vadd.f32 %v245, %v544
  %546 = vdwg.mxu0
  %547 = vmatpush.msra.mxu0 0.0
  %548 = vmatpush.msra.mxu0 0.0
  %549 = vmatpush.msra.mxu0 0.0
  %550 = vmatpush.msra.mxu0 0.0
  %551 = vmatpush.msra.mxu0 0.0
  %552 = vmatpush.msra.mxu0 0.0
  %553 = vmatpush.msra.mxu0 0.0
  %554 = vmatpush.msra.mxu0 0.0
  %555 = vmatpush.msra.mxu0 0.0
  %556 = vmatpush.msra.mxu0 0.0
  %557 = vmatpush.msra.mxu0 0.0
  %558 = vmatpush.msra.mxu0 0.0
  %559 = vmatpush.msra.mxu0 %v226
  %560 = vmatpush.msra.mxu0 %v210
  %561 = vmatpush.msra.mxu0 %v194
  %562 = vmatpush.msra.mxu0 %v178
  %563 = vmatmul.f32.gmra.mxu0 %v265
  %v564 = vpop.f32.mrf.mxu0
  %v565 = vadd.f32 %v246, %v564
  %566 = vdwg.mxu0
  %567 = vmatpush.msra.mxu0 0.0
  %568 = vmatpush.msra.mxu0 0.0
  %569 = vmatpush.msra.mxu0 0.0
  %570 = vmatpush.msra.mxu0 0.0
  %571 = vmatpush.msra.mxu0 0.0
  %572 = vmatpush.msra.mxu0 0.0
  %573 = vmatpush.msra.mxu0 0.0
  %574 = vmatpush.msra.mxu0 0.0
  %575 = vmatpush.msra.mxu0 0.0
  %576 = vmatpush.msra.mxu0 0.0
  %577 = vmatpush.msra.mxu0 0.0
  %578 = vmatpush.msra.mxu0 0.0
  %579 = vmatpush.msra.mxu0 %v227
  %580 = vmatpush.msra.mxu0 %v211
  %581 = vmatpush.msra.mxu0 %v195
  %582 = vmatpush.msra.mxu0 %v179
  %583 = vmatmul.f32.gmra.mxu0 %v265
  %v584 = vpop.f32.mrf.mxu0
  %v585 = vadd.f32 %v247, %v584
  %586 = vdwg.mxu0
  %v587 = vmax.f32 %v285, 0.0
  %v588 = vmax.f32 %v305, 0.0
  %v589 = vmax.f32 %v325, 0.0
  %v590 = vmax.f32 %v345, 0.0
  %v591 = vmax.f32 %v365, 0.0
  %v592 = vmax.f32 %v385, 0.0
  %v593 = vmax.f32 %v405, 0.0
  %v594 = vmax.f32 %v425, 0.0
  %v595 = vmax.f32 %v445, 0.0
  %v596 = vmax.f32 %v465, 0.0
  %v597 = vmax.f32 %v485, 0.0
  %v598 = vmax.f32 %v505, 0.0
  %v599 = vmax.f32 %v525, 0.0
  %v600 = vmax.f32 %v545, 0.0
  %v601 = vmax.f32 %v565, 0.0
  %v602 = vmax.f32 %v585, 0.0
  %v603 = vld [vmem:[%s7] sm:$0xff]
  %v604 = vld [vmem:[%s7 + $0x8] sm:$0xff]
  %v605 = vld [vmem:[%s7 + $0x10] sm:$0xff]
  %v606 = vld [vmem:[%s7 + $0x18] sm:$0xff]
  %v607 = vld [vmem:[%s7 + $0x20] sm:$0xff]
  %v608 = vld [vmem:[%s7 + $0x28] sm:$0xff]
  %v609 = vld [vmem:[%s7 + $0x30] sm:$0xff]
  %v610 = vld [vmem:[%s7 + $0x38] sm:$0xff]
  %v611 = vld [vmem:[%s7 + $0x40] sm:$0xff]
  %v612 = vld [vmem:[%s7 + $0x48] sm:$0xff]
  %v613 = vld [vmem:[%s7 + $0x50] sm:$0xff]
  %v614 = vld [vmem:[%s7 + $0x58] sm:$0xff]
  %v615 = vld [vmem:[%s7 + $0x60] sm:$0xff]
  %v616 = vld [vmem:[%s7 + $0x68] sm:$0xff]
  %v617 = vld [vmem:[%s7 + $0x70] sm:$0xff]
  %v618 = vld [vmem:[%s7 + $0x78] sm:$0xff]
  %v619 = vld [vmem:[%s7 + $0x80] sm:$0xff]
  %v620 = vld [vmem:[%s7 + $0x88] sm:$0xff]
  %v621 = vld [vmem:[%s7 + $0x90] sm:$0xff]
  %v622 = vld [vmem:[%s7 + $0x98] sm:$0xff]
  %v623 = vld [vmem:[%s7 + $0xa0] sm:$0xff]
  %v624 = vld [vmem:[%s7 + $0xa8] sm:$0xff]
  %v625 = vld [vmem:[%s7 + $0xb0] sm:$0xff]
  %v626 = vld [vmem:[%s7 + $0xb8] sm:$0xff]
  %v627 = vld [vmem:[%s7 + $0xc0] sm:$0xff]
  %v628 = vld [vmem:[%s7 + $0xc8] sm:$0xff]
  %v629 = vld [vmem:[%s7 + $0xd0] sm:$0xff]
  %v630 = vld [vmem:[%s7 + $0xd8] sm:$0xff]
  %v631 = vld [vmem:[%s7 + $0xe0] sm:$0xff]
  %v632 = vld [vmem:[%s7 + $0xe8] sm:$0xff]
  %v633 = vld [vmem:[%s7 + $0xf0] sm:$0xff]
  %v634 = vld [vmem:[%s7 + $0xf8] sm:$0xff]
  %v635 = vld [vmem:[%s7 + $0x100] sm:$0xff]
  %v636 = vld [vmem:[%s7 + $0x108] sm:$0xff]
  %v637 = vld [vmem:[%s7 + $0x110] sm:$0xff]
  %v638 = vld [vmem:[%s7 + $0x118] sm:$0xff]
  %v639 = vld [vmem:[%s7 + $0x120] sm:$0xff]
  %v640 = vld [vmem:[%s7 + $0x128] sm:$0xff]
  %v641 = vld [vmem:[%s7 + $0x130] sm:$0xff]
  %v642 = vld [vmem:[%s7 + $0x138] sm:$0xff]
  %v643 = vld [vmem:[%s7 + $0x140] sm:$0xff]
  %v644 = vld [vmem:[%s7 + $0x148] sm:$0xff]
  %v645 = vld [vmem:[%s7 + $0x150] sm:$0xff]
  %v646 = vld [vmem:[%s7 + $0x158] sm:$0xff]
  %v647 = vld [vmem:[%s7 + $0x160] sm:$0xff]
  %v648 = vld [vmem:[%s7 + $0x168] sm:$0xff]
  %v649 = vld [vmem:[%s7 + $0x170] sm:$0xff]
  %v650 = vld [vmem:[%s7 + $0x178] sm:$0xff]
  %v651 = vld [vmem:[%s7 + $0x180] sm:$0xff]
  %v652 = vld [vmem:[%s7 + $0x188] sm:$0xff]
  %v653 = vld [vmem:[%s7 + $0x190] sm:$0xff]
  %v654 = vld [vmem:[%s7 + $0x198] sm:$0xff]
  %v655 = vld [vmem:[%s7 + $0x1a0] sm:$0xff]
  %v656 = vld [vmem:[%s7 + $0x1a8] sm:$0xff]
  %v657 = vld [vmem:[%s7 + $0x1b0] sm:$0xff]
  %v658 = vld [vmem:[%s7 + $0x1b8] sm:$0xff]
  %v659 = vld [vmem:[%s7 + $0x1c0] sm:$0xff]
  %v660 = vld [vmem:[%s7 + $0x1c8] sm:$0xff]
  %v661 = vld [vmem:[%s7 + $0x1d0] sm:$0xff]
  %v662 = vld [vmem:[%s7 + $0x1d8] sm:$0xff]
  %v663 = vld [vmem:[%s7 + $0x1e0] sm:$0xff]
  %v664 = vld [vmem:[%s7 + $0x1e8] sm:$0xff]
  %v665 = vld [vmem:[%s7 + $0x1f0] sm:$0xff]
  %v666 = vld [vmem:[%s7 + $0x1f8] sm:$0xff]
  %v667 = vld [vmem:[%s7 + $0x200] sm:$0xff]
  %v668 = vld [vmem:[%s7 + $0x208] sm:$0xff]
  %v669 = vld [vmem:[%s7 + $0x210] sm:$0xff]
  %v670 = vld [vmem:[%s7 + $0x218] sm:$0xff]
  %v671 = vld [vmem:[%s7 + $0x220] sm:$0xff]
  %v672 = vld [vmem:[%s7 + $0x228] sm:$0xff]
  %v673 = vld [vmem:[%s7 + $0x230] sm:$0xff]
  %v674 = vld [vmem:[%s7 + $0x238] sm:$0xff]
  %v675 = vld [vmem:[%s7 + $0x240] sm:$0xff]
  %v676 = vld [vmem:[%s7 + $0x248] sm:$0xff]
  %v677 = vld [vmem:[%s7 + $0x250] sm:$0xff]
  %v678 = vld [vmem:[%s7 + $0x258] sm:$0xff]
  %v679 = vld [vmem:[%s7 + $0x260] sm:$0xff]
  %v680 = vld [vmem:[%s7 + $0x268] sm:$0xff]
  %v681 = vld [vmem:[%s7 + $0x270] sm:$0xff]
  %v682 = vld [vmem:[%s7 + $0x278] sm:$0xff]
  %v683 = vld [vmem:[%s7 + $0x280] sm:$0xff]
  %v684 = vld [vmem:[%s7 + $0x288] sm:$0xff]
  %v685 = vld [vmem:[%s7 + $0x290] sm:$0xff]
  %v686 = vld [vmem:[%s7 + $0x298] sm:$0xff]
  %v687 = vld [vmem:[%s7 + $0x2a0] sm:$0xff]
  %v688 = vld [vmem:[%s7 + $0x2a8] sm:$0xff]
  %v689 = vld [vmem:[%s7 + $0x2b0] sm:$0xff]
  %v690 = vld [vmem:[%s7 + $0x2b8] sm:$0xff]
  %v691 = vld [vmem:[%s7 + $0x2c0] sm:$0xff]
  %v692 = vld [vmem:[%s7 + $0x2c8] sm:$0xff]
  %v693 = vld [vmem:[%s7 + $0x2d0] sm:$0xff]
  %v694 = vld [vmem:[%s7 + $0x2d8] sm:$0xff]
  %v695 = vld [vmem:[%s7 + $0x2e0] sm:$0xff]
  %v696 = vld [vmem:[%s7 + $0x2e8] sm:$0xff]
  %v697 = vld [vmem:[%s7 + $0x2f0] sm:$0xff]
  %v698 = vld [vmem:[%s7 + $0x2f8] sm:$0xff]
  %v699 = vld [vmem:[%s7 + $0x300] sm:$0xff]
  %v700 = vld [vmem:[%s7 + $0x308] sm:$0xff]
  %v701 = vld [vmem:[%s7 + $0x310] sm:$0xff]
  %v702 = vld [vmem:[%s7 + $0x318] sm:$0xff]
  %v703 = vld [vmem:[%s7 + $0x320] sm:$0xff]
  %v704 = vld [vmem:[%s7 + $0x328] sm:$0xff]
  %v705 = vld [vmem:[%s7 + $0x330] sm:$0xff]
  %v706 = vld [vmem:[%s7 + $0x338] sm:$0xff]
  %v707 = vld [vmem:[%s7 + $0x340] sm:$0xff]
  %v708 = vld [vmem:[%s7 + $0x348] sm:$0xff]
  %v709 = vld [vmem:[%s7 + $0x350] sm:$0xff]
  %v710 = vld [vmem:[%s7 + $0x358] sm:$0xff]
  %v711 = vld [vmem:[%s7 + $0x360] sm:$0xff]
  %v712 = vld [vmem:[%s7 + $0x368] sm:$0xff]
  %v713 = vld [vmem:[%s7 + $0x370] sm:$0xff]
  %v714 = vld [vmem:[%s7 + $0x378] sm:$0xff]
  %v715 = vld [vmem:[%s7 + $0x380] sm:$0xff]
  %v716 = vld [vmem:[%s7 + $0x388] sm:$0xff]
  %v717 = vld [vmem:[%s7 + $0x390] sm:$0xff]
  %v718 = vld [vmem:[%s7 + $0x398] sm:$0xff]
  %v719 = vld [vmem:[%s7 + $0x3a0] sm:$0xff]
  %v720 = vld [vmem:[%s7 + $0x3a8] sm:$0xff]
  %v721 = vld [vmem:[%s7 + $0x3b0] sm:$0xff]
  %v722 = vld [vmem:[%s7 + $0x3b8] sm:$0xff]
  %v723 = vld [vmem:[%s7 + $0x3c0] sm:$0xff]
  %v724 = vld [vmem:[%s7 + $0x3c8] sm:$0xff]
  %v725 = vld [vmem:[%s7 + $0x3d0] sm:$0xff]
  %v726 = vld [vmem:[%s7 + $0x3d8] sm:$0xff]
  %v727 = vld [vmem:[%s7 + $0x3e0] sm:$0xff]
  %v728 = vld [vmem:[%s7 + $0x3e8] sm:$0xff]
  %v729 = vld [vmem:[%s7 + $0x3f0] sm:$0xff]
  %v730 = vld [vmem:[%s7 + $0x3f8] sm:$0xff]
  %v731 = vld [vmem:[%s7 + $0x400] sm:$0xff]
  %v732 = vld [vmem:[%s7 + $0x408] sm:$0xff]
  %v733 = vld [vmem:[%s7 + $0x410] sm:$0xff]
  %v734 = vld [vmem:[%s7 + $0x418] sm:$0xff]
  %v735 = vld [vmem:[%s7 + $0x420] sm:$0xff]
  %v736 = vld [vmem:[%s7 + $0x428] sm:$0xff]
  %v737 = vld [vmem:[%s7 + $0x430] sm:$0xff]
  %v738 = vld [vmem:[%s7 + $0x438] sm:$0xff]
  %v739 = vld [vmem:[%s7 + $0x440] sm:$0xff]
  %v740 = vld [vmem:[%s7 + $0x448] sm:$0xff]
  %v741 = vld [vmem:[%s7 + $0x450] sm:$0xff]
  %v742 = vld [vmem:[%s7 + $0x458] sm:$0xff]
  %v743 = vld [vmem:[%s7 + $0x460] sm:$0xff]
  %v744 = vld [vmem:[%s7 + $0x468] sm:$0xff]
  %v745 = vld [vmem:[%s7 + $0x470] sm:$0xff]
  %v746 = vld [vmem:[%s7 + $0x478] sm:$0xff]
  %v747 = vld [vmem:[%s7 + $0x480] sm:$0xff]
  %v748 = vld [vmem:[%s7 + $0x488] sm:$0xff]
  %v749 = vld [vmem:[%s7 + $0x490] sm:$0xff]
  %v750 = vld [vmem:[%s7 + $0x498] sm:$0xff]
  %v751 = vld [vmem:[%s7 + $0x4a0] sm:$0xff]
  %v752 = vld [vmem:[%s7 + $0x4a8] sm:$0xff]
  %v753 = vld [vmem:[%s7 + $0x4b0] sm:$0xff]
  %v754 = vld [vmem:[%s7 + $0x4b8] sm:$0xff]
  %v755 = vld [vmem:[%s7 + $0x4c0] sm:$0xff]
  %v756 = vld [vmem:[%s7 + $0x4c8] sm:$0xff]
  %v757 = vld [vmem:[%s7 + $0x4d0] sm:$0xff]
  %v758 = vld [vmem:[%s7 + $0x4d8] sm:$0xff]
  %v759 = vld [vmem:[%s7 + $0x4e0] sm:$0xff]
  %v760 = vld [vmem:[%s7 + $0x4e8] sm:$0xff]
  %v761 = vld [vmem:[%s7 + $0x4f0] sm:$0xff]
  %v762 = vld [vmem:[%s7 + $0x4f8] sm:$0xff]
  %v763 = vld [vmem:[%s7 + $0x500] sm:$0xff]
  %v764 = vld [vmem:[%s7 + $0x508] sm:$0xff]
  %v765 = vld [vmem:[%s7 + $0x510] sm:$0xff]
  %v766 = vld [vmem:[%s7 + $0x518] sm:$0xff]
  %v767 = vld [vmem:[%s7 + $0x520] sm:$0xff]
  %v768 = vld [vmem:[%s7 + $0x528] sm:$0xff]
  %v769 = vld [vmem:[%s7 + $0x530] sm:$0xff]
  %v770 = vld [vmem:[%s7 + $0x538] sm:$0xff]
  %v771 = vld [vmem:[%s7 + $0x540] sm:$0xff]
  %v772 = vld [vmem:[%s7 + $0x548] sm:$0xff]
  %v773 = vld [vmem:[%s7 + $0x550] sm:$0xff]
  %v774 = vld [vmem:[%s7 + $0x558] sm:$0xff]
  %v775 = vld [vmem:[%s7 + $0x560] sm:$0xff]
  %v776 = vld [vmem:[%s7 + $0x568] sm:$0xff]
  %v777 = vld [vmem:[%s7 + $0x570] sm:$0xff]
  %v778 = vld [vmem:[%s7 + $0x578] sm:$0xff]
  %v779 = vld [vmem:[%s7 + $0x580] sm:$0xff]
  %v780 = vld [vmem:[%s7 + $0x588] sm:$0xff]
  %v781 = vld [vmem:[%s7 + $0x590] sm:$0xff]
  %v782 = vld [vmem:[%s7 + $0x598] sm:$0xff]
  %v783 = vld [vmem:[%s7 + $0x5a0] sm:$0xff]
  %v784 = vld [vmem:[%s7 + $0x5a8] sm:$0xff]
  %v785 = vld [vmem:[%s7 + $0x5b0] sm:$0xff]
  %v786 = vld [vmem:[%s7 + $0x5b8] sm:$0xff]
  %v787 = vld [vmem:[%s7 + $0x5c0] sm:$0xff]
  %v788 = vld [vmem:[%s7 + $0x5c8] sm:$0xff]
  %v789 = vld [vmem:[%s7 + $0x5d0] sm:$0xff]
  %v790 = vld [vmem:[%s7 + $0x5d8] sm:$0xff]
  %v791 = vld [vmem:[%s7 + $0x5e0] sm:$0xff]
  %v792 = vld [vmem:[%s7 + $0x5e8] sm:$0xff]
  %v793 = vld [vmem:[%s7 + $0x5f0] sm:$0xff]
  %v794 = vld [vmem:[%s7 + $0x5f8] sm:$0xff]
  %v795 = vld [vmem:[%s7 + $0x600] sm:$0xff]
  %v796 = vld [vmem:[%s7 + $0x608] sm:$0xff]
  %v797 = vld [vmem:[%s7 + $0x610] sm:$0xff]
  %v798 = vld [vmem:[%s7 + $0x618] sm:$0xff]
  %v799 = vld [vmem:[%s7 + $0x620] sm:$0xff]
  %v800 = vld [vmem:[%s7 + $0x628] sm:$0xff]
  %v801 = vld [vmem:[%s7 + $0x630] sm:$0xff]
  %v802 = vld [vmem:[%s7 + $0x638] sm:$0xff]
  %v803 = vld [vmem:[%s7 + $0x640] sm:$0xff]
  %v804 = vld [vmem:[%s7 + $0x648] sm:$0xff]
  %v805 = vld [vmem:[%s7 + $0x650] sm:$0xff]
  %v806 = vld [vmem:[%s7 + $0x658] sm:$0xff]
  %v807 = vld [vmem:[%s7 + $0x660] sm:$0xff]
  %v808 = vld [vmem:[%s7 + $0x668] sm:$0xff]
  %v809 = vld [vmem:[%s7 + $0x670] sm:$0xff]
  %v810 = vld [vmem:[%s7 + $0x678] sm:$0xff]
  %v811 = vld [vmem:[%s7 + $0x680] sm:$0xff]
  %v812 = vld [vmem:[%s7 + $0x688] sm:$0xff]
  %v813 = vld [vmem:[%s7 + $0x690] sm:$0xff]
  %v814 = vld [vmem:[%s7 + $0x698] sm:$0xff]
  %v815 = vld [vmem:[%s7 + $0x6a0] sm:$0xff]
  %v816 = vld [vmem:[%s7 + $0x6a8] sm:$0xff]
  %v817 = vld [vmem:[%s7 + $0x6b0] sm:$0xff]
  %v818 = vld [vmem:[%s7 + $0x6b8] sm:$0xff]
  %v819 = vld [vmem:[%s7 + $0x6c0] sm:$0xff]
  %v820 = vld [vmem:[%s7 + $0x6c8] sm:$0xff]
  %v821 = vld [vmem:[%s7 + $0x6d0] sm:$0xff]
  %v822 = vld [vmem:[%s7 + $0x6d8] sm:$0xff]
  %v823 = vld [vmem:[%s7 + $0x6e0] sm:$0xff]
  %v824 = vld [vmem:[%s7 + $0x6e8] sm:$0xff]
  %v825 = vld [vmem:[%s7 + $0x6f0] sm:$0xff]
  %v826 = vld [vmem:[%s7 + $0x6f8] sm:$0xff]
  %v827 = vld [vmem:[%s7 + $0x700] sm:$0xff]
  %v828 = vld [vmem:[%s7 + $0x708] sm:$0xff]
  %v829 = vld [vmem:[%s7 + $0x710] sm:$0xff]
  %v830 = vld [vmem:[%s7 + $0x718] sm:$0xff]
  %v831 = vld [vmem:[%s7 + $0x720] sm:$0xff]
  %v832 = vld [vmem:[%s7 + $0x728] sm:$0xff]
  %v833 = vld [vmem:[%s7 + $0x730] sm:$0xff]
  %v834 = vld [vmem:[%s7 + $0x738] sm:$0xff]
  %v835 = vld [vmem:[%s7 + $0x740] sm:$0xff]
  %v836 = vld [vmem:[%s7 + $0x748] sm:$0xff]
  %v837 = vld [vmem:[%s7 + $0x750] sm:$0xff]
  %v838 = vld [vmem:[%s7 + $0x758] sm:$0xff]
  %v839 = vld [vmem:[%s7 + $0x760] sm:$0xff]
  %v840 = vld [vmem:[%s7 + $0x768] sm:$0xff]
  %v841 = vld [vmem:[%s7 + $0x770] sm:$0xff]
  %v842 = vld [vmem:[%s7 + $0x778] sm:$0xff]
  %v843 = vld [vmem:[%s7 + $0x780] sm:$0xff]
  %v844 = vld [vmem:[%s7 + $0x788] sm:$0xff]
  %v845 = vld [vmem:[%s7 + $0x790] sm:$0xff]
  %v846 = vld [vmem:[%s7 + $0x798] sm:$0xff]
  %v847 = vld [vmem:[%s7 + $0x7a0] sm:$0xff]
  %v848 = vld [vmem:[%s7 + $0x7a8] sm:$0xff]
  %v849 = vld [vmem:[%s7 + $0x7b0] sm:$0xff]
  %v850 = vld [vmem:[%s7 + $0x7b8] sm:$0xff]
  %v851 = vld [vmem:[%s7 + $0x7c0] sm:$0xff]
  %v852 = vld [vmem:[%s7 + $0x7c8] sm:$0xff]
  %v853 = vld [vmem:[%s7 + $0x7d0] sm:$0xff]
  %v854 = vld [vmem:[%s7 + $0x7d8] sm:$0xff]
  %v855 = vld [vmem:[%s7 + $0x7e0] sm:$0xff]
  %v856 = vld [vmem:[%s7 + $0x7e8] sm:$0xff]
  %v857 = vld [vmem:[%s7 + $0x7f0] sm:$0xff]
  %v858 = vld [vmem:[%s7 + $0x7f8] sm:$0xff]
  %v859 = vld [vmem:[%s8] sm:$0x1]
  %v861 = vperm.slane %v859, 0
  %863 = vmatpush.msra.mxu0 %v618
  %864 = vmatpush.msra.mxu0 %v617
  %865 = vmatpush.msra.mxu0 %v616
  %866 = vmatpush.msra.mxu0 %v615
  %867 = vmatpush.msra.mxu0 %v614
  %868 = vmatpush.msra.mxu0 %v613
  %869 = vmatpush.msra.mxu0 %v612
  %870 = vmatpush.msra.mxu0 %v611
  %871 = vmatpush.msra.mxu0 %v610
  %872 = vmatpush.msra.mxu0 %v609
  %873 = vmatpush.msra.mxu0 %v608
  %874 = vmatpush.msra.mxu0 %v607
  %875 = vmatpush.msra.mxu0 %v606
  %876 = vmatpush.msra.mxu0 %v605
  %877 = vmatpush.msra.mxu0 %v604
  %878 = vmatpush.msra.mxu0 %v603
  %879 = vmatmul.f32.gmra.mxu0 %v587
  %v880 = vpop.f32.mrf.mxu0
  %v881 = vadd.f32 %v861, %v880
  %882 = vdwg.mxu0
  %883 = vmatpush.msra.mxu0 %v634
  %884 = vmatpush.msra.mxu0 %v633
  %885 = vmatpush.msra.mxu0 %v632
  %886 = vmatpush.msra.mxu0 %v631
  %887 = vmatpush.msra.mxu0 %v630
  %888 = vmatpush.msra.mxu0 %v629
  %889 = vmatpush.msra.mxu0 %v628
  %890 = vmatpush.msra.mxu0 %v627
  %891 = vmatpush.msra.mxu0 %v626
  %892 = vmatpush.msra.mxu0 %v625
  %893 = vmatpush.msra.mxu0 %v624
  %894 = vmatpush.msra.mxu0 %v623
  %895 = vmatpush.msra.mxu0 %v622
  %896 = vmatpush.msra.mxu0 %v621
  %897 = vmatpush.msra.mxu0 %v620
  %898 = vmatpush.msra.mxu0 %v619
  %899 = vmatmul.f32.gmra.mxu0 %v588
  %v900 = vpop.f32.mrf.mxu0
  %v901 = vadd.f32 %v881, %v900
  %902 = vdwg.mxu0
  %903 = vmatpush.msra.mxu0 %v650
  %904 = vmatpush.msra.mxu0 %v649
  %905 = vmatpush.msra.mxu0 %v648
  %906 = vmatpush.msra.mxu0 %v647
  %907 = vmatpush.msra.mxu0 %v646
  %908 = vmatpush.msra.mxu0 %v645
  %909 = vmatpush.msra.mxu0 %v644
  %910 = vmatpush.msra.mxu0 %v643
  %911 = vmatpush.msra.mxu0 %v642
  %912 = vmatpush.msra.mxu0 %v641
  %913 = vmatpush.msra.mxu0 %v640
  %914 = vmatpush.msra.mxu0 %v639
  %915 = vmatpush.msra.mxu0 %v638
  %916 = vmatpush.msra.mxu0 %v637
  %917 = vmatpush.msra.mxu0 %v636
  %918 = vmatpush.msra.mxu0 %v635
  %919 = vmatmul.f32.gmra.mxu0 %v589
  %v920 = vpop.f32.mrf.mxu0
  %v921 = vadd.f32 %v901, %v920
  %922 = vdwg.mxu0
  %923 = vmatpush.msra.mxu0 %v666
  %924 = vmatpush.msra.mxu0 %v665
  %925 = vmatpush.msra.mxu0 %v664
  %926 = vmatpush.msra.mxu0 %v663
  %927 = vmatpush.msra.mxu0 %v662
  %928 = vmatpush.msra.mxu0 %v661
  %929 = vmatpush.msra.mxu0 %v660
  %930 = vmatpush.msra.mxu0 %v659
  %931 = vmatpush.msra.mxu0 %v658
  %932 = vmatpush.msra.mxu0 %v657
  %933 = vmatpush.msra.mxu0 %v656
  %934 = vmatpush.msra.mxu0 %v655
  %935 = vmatpush.msra.mxu0 %v654
  %936 = vmatpush.msra.mxu0 %v653
  %937 = vmatpush.msra.mxu0 %v652
  %938 = vmatpush.msra.mxu0 %v651
  %939 = vmatmul.f32.gmra.mxu0 %v590
  %v940 = vpop.f32.mrf.mxu0
  %v941 = vadd.f32 %v921, %v940
  %942 = vdwg.mxu0
  %943 = vmatpush.msra.mxu0 %v682
  %944 = vmatpush.msra.mxu0 %v681
  %945 = vmatpush.msra.mxu0 %v680
  %946 = vmatpush.msra.mxu0 %v679
  %947 = vmatpush.msra.mxu0 %v678
  %948 = vmatpush.msra.mxu0 %v677
  %949 = vmatpush.msra.mxu0 %v676
  %950 = vmatpush.msra.mxu0 %v675
  %951 = vmatpush.msra.mxu0 %v674
  %952 = vmatpush.msra.mxu0 %v673
  %953 = vmatpush.msra.mxu0 %v672
  %954 = vmatpush.msra.mxu0 %v671
  %955 = vmatpush.msra.mxu0 %v670
  %956 = vmatpush.msra.mxu0 %v669
  %957 = vmatpush.msra.mxu0 %v668
  %958 = vmatpush.msra.mxu0 %v667
  %959 = vmatmul.f32.gmra.mxu0 %v591
  %v960 = vpop.f32.mrf.mxu0
  %v961 = vadd.f32 %v941, %v960
  %962 = vdwg.mxu0
  %963 = vmatpush.msra.mxu0 %v698
  %964 = vmatpush.msra.mxu0 %v697
  %965 = vmatpush.msra.mxu0 %v696
  %966 = vmatpush.msra.mxu0 %v695
  %967 = vmatpush.msra.mxu0 %v694
  %968 = vmatpush.msra.mxu0 %v693
  %969 = vmatpush.msra.mxu0 %v692
  %970 = vmatpush.msra.mxu0 %v691
  %971 = vmatpush.msra.mxu0 %v690
  %972 = vmatpush.msra.mxu0 %v689
  %973 = vmatpush.msra.mxu0 %v688
  %974 = vmatpush.msra.mxu0 %v687
  %975 = vmatpush.msra.mxu0 %v686
  %976 = vmatpush.msra.mxu0 %v685
  %977 = vmatpush.msra.mxu0 %v684
  %978 = vmatpush.msra.mxu0 %v683
  %979 = vmatmul.f32.gmra.mxu0 %v592
  %v980 = vpop.f32.mrf.mxu0
  %v981 = vadd.f32 %v961, %v980
  %982 = vdwg.mxu0
  %983 = vmatpush.msra.mxu0 %v714
  %984 = vmatpush.msra.mxu0 %v713
  %985 = vmatpush.msra.mxu0 %v712
  %986 = vmatpush.msra.mxu0 %v711
  %987 = vmatpush.msra.mxu0 %v710
  %988 = vmatpush.msra.mxu0 %v709
  %989 = vmatpush.msra.mxu0 %v708
  %990 = vmatpush.msra.mxu0 %v707
  %991 = vmatpush.msra.mxu0 %v706
  %992 = vmatpush.msra.mxu0 %v705
  %993 = vmatpush.msra.mxu0 %v704
  %994 = vmatpush.msra.mxu0 %v703
  %995 = vmatpush.msra.mxu0 %v702
  %996 = vmatpush.msra.mxu0 %v701
  %997 = vmatpush.msra.mxu0 %v700
  %998 = vmatpush.msra.mxu0 %v699
  %999 = vmatmul.f32.gmra.mxu0 %v593
  %v1000 = vpop.f32.mrf.mxu0
  %v1001 = vadd.f32 %v981, %v1000
  %1002 = vdwg.mxu0
  %1003 = vmatpush.msra.mxu0 %v730
  %1004 = vmatpush.msra.mxu0 %v729
  %1005 = vmatpush.msra.mxu0 %v728
  %1006 = vmatpush.msra.mxu0 %v727
  %1007 = vmatpush.msra.mxu0 %v726
  %1008 = vmatpush.msra.mxu0 %v725
  %1009 = vmatpush.msra.mxu0 %v724
  %1010 = vmatpush.msra.mxu0 %v723
  %1011 = vmatpush.msra.mxu0 %v722
  %1012 = vmatpush.msra.mxu0 %v721
  %1013 = vmatpush.msra.mxu0 %v720
  %1014 = vmatpush.msra.mxu0 %v719
  %1015 = vmatpush.msra.mxu0 %v718
  %1016 = vmatpush.msra.mxu0 %v717
  %1017 = vmatpush.msra.mxu0 %v716
  %1018 = vmatpush.msra.mxu0 %v715
  %1019 = vmatmul.f32.gmra.mxu0 %v594
  %v1020 = vpop.f32.mrf.mxu0
  %v1021 = vadd.f32 %v1001, %v1020
  %1022 = vdwg.mxu0
  %1023 = vmatpush.msra.mxu0 %v746
  %1024 = vmatpush.msra.mxu0 %v745
  %1025 = vmatpush.msra.mxu0 %v744
  %1026 = vmatpush.msra.mxu0 %v743
  %1027 = vmatpush.msra.mxu0 %v742
  %1028 = vmatpush.msra.mxu0 %v741
  %1029 = vmatpush.msra.mxu0 %v740
  %1030 = vmatpush.msra.mxu0 %v739
  %1031 = vmatpush.msra.mxu0 %v738
  %1032 = vmatpush.msra.mxu0 %v737
  %1033 = vmatpush.msra.mxu0 %v736
  %1034 = vmatpush.msra.mxu0 %v735
  %1035 = vmatpush.msra.mxu0 %v734
  %1036 = vmatpush.msra.mxu0 %v733
  %1037 = vmatpush.msra.mxu0 %v732
  %1038 = vmatpush.msra.mxu0 %v731
  %1039 = vmatmul.f32.gmra.mxu0 %v595
  %v1040 = vpop.f32.mrf.mxu0
  %v1041 = vadd.f32 %v1021, %v1040
  %1042 = vdwg.mxu0
  %1043 = vmatpush.msra.mxu0 %v762
  %1044 = vmatpush.msra.mxu0 %v761
  %1045 = vmatpush.msra.mxu0 %v760
  %1046 = vmatpush.msra.mxu0 %v759
  %1047 = vmatpush.msra.mxu0 %v758
  %1048 = vmatpush.msra.mxu0 %v757
  %1049 = vmatpush.msra.mxu0 %v756
  %1050 = vmatpush.msra.mxu0 %v755
  %1051 = vmatpush.msra.mxu0 %v754
  %1052 = vmatpush.msra.mxu0 %v753
  %1053 = vmatpush.msra.mxu0 %v752
  %1054 = vmatpush.msra.mxu0 %v751
  %1055 = vmatpush.msra.mxu0 %v750
  %1056 = vmatpush.msra.mxu0 %v749
  %1057 = vmatpush.msra.mxu0 %v748
  %1058 = vmatpush.msra.mxu0 %v747
  %1059 = vmatmul.f32.gmra.mxu0 %v596
  %v1060 = vpop.f32.mrf.mxu0
  %v1061 = vadd.f32 %v1041, %v1060
  %1062 = vdwg.mxu0
  %1063 = vmatpush.msra.mxu0 %v778
  %1064 = vmatpush.msra.mxu0 %v777
  %1065 = vmatpush.msra.mxu0 %v776
  %1066 = vmatpush.msra.mxu0 %v775
  %1067 = vmatpush.msra.mxu0 %v774
  %1068 = vmatpush.msra.mxu0 %v773
  %1069 = vmatpush.msra.mxu0 %v772
  %1070 = vmatpush.msra.mxu0 %v771
  %1071 = vmatpush.msra.mxu0 %v770
  %1072 = vmatpush.msra.mxu0 %v769
  %1073 = vmatpush.msra.mxu0 %v768
  %1074 = vmatpush.msra.mxu0 %v767
  %1075 = vmatpush.msra.mxu0 %v766
  %1076 = vmatpush.msra.mxu0 %v765
  %1077 = vmatpush.msra.mxu0 %v764
  %1078 = vmatpush.msra.mxu0 %v763
  %1079 = vmatmul.f32.gmra.mxu0 %v597
  %v1080 = vpop.f32.mrf.mxu0
  %v1081 = vadd.f32 %v1061, %v1080
  %1082 = vdwg.mxu0
  %1083 = vmatpush.msra.mxu0 %v794
  %1084 = vmatpush.msra.mxu0 %v793
  %1085 = vmatpush.msra.mxu0 %v792
  %1086 = vmatpush.msra.mxu0 %v791
  %1087 = vmatpush.msra.mxu0 %v790
  %1088 = vmatpush.msra.mxu0 %v789
  %1089 = vmatpush.msra.mxu0 %v788
  %1090 = vmatpush.msra.mxu0 %v787
  %1091 = vmatpush.msra.mxu0 %v786
  %1092 = vmatpush.msra.mxu0 %v785
  %1093 = vmatpush.msra.mxu0 %v784
  %1094 = vmatpush.msra.mxu0 %v783
  %1095 = vmatpush.msra.mxu0 %v782
  %1096 = vmatpush.msra.mxu0 %v781
  %1097 = vmatpush.msra.mxu0 %v780
  %1098 = vmatpush.msra.mxu0 %v779
  %1099 = vmatmul.f32.gmra.mxu0 %v598
  %v1100 = vpop.f32.mrf.mxu0
  %v1101 = vadd.f32 %v1081, %v1100
  %1102 = vdwg.mxu0
  %1103 = vmatpush.msra.mxu0 %v810
  %1104 = vmatpush.msra.mxu0 %v809
  %1105 = vmatpush.msra.mxu0 %v808
  %1106 = vmatpush.msra.mxu0 %v807
  %1107 = vmatpush.msra.mxu0 %v806
  %1108 = vmatpush.msra.mxu0 %v805
  %1109 = vmatpush.msra.mxu0 %v804
  %1110 = vmatpush.msra.mxu0 %v803
  %1111 = vmatpush.msra.mxu0 %v802
  %1112 = vmatpush.msra.mxu0 %v801
  %1113 = vmatpush.msra.mxu0 %v800
  %1114 = vmatpush.msra.mxu0 %v799
  %1115 = vmatpush.msra.mxu0 %v798
  %1116 = vmatpush.msra.mxu0 %v797
  %1117 = vmatpush.msra.mxu0 %v796
  %1118 = vmatpush.msra.mxu0 %v795
  %1119 = vmatmul.f32.gmra.mxu0 %v599
  %v1120 = vpop.f32.mrf.mxu0
  %v1121 = vadd.f32 %v1101, %v1120
  %1122 = vdwg.mxu0
  %1123 = vmatpush.msra.mxu0 %v826
  %1124 = vmatpush.msra.mxu0 %v825
  %1125 = vmatpush.msra.mxu0 %v824
  %1126 = vmatpush.msra.mxu0 %v823
  %1127 = vmatpush.msra.mxu0 %v822
  %1128 = vmatpush.msra.mxu0 %v821
  %1129 = vmatpush.msra.mxu0 %v820
  %1130 = vmatpush.msra.mxu0 %v819
  %1131 = vmatpush.msra.mxu0 %v818
  %1132 = vmatpush.msra.mxu0 %v817
  %1133 = vmatpush.msra.mxu0 %v816
  %1134 = vmatpush.msra.mxu0 %v815
  %1135 = vmatpush.msra.mxu0 %v814
  %1136 = vmatpush.msra.mxu0 %v813
  %1137 = vmatpush.msra.mxu0 %v812
  %1138 = vmatpush.msra.mxu0 %v811
  %1139 = vmatmul.f32.gmra.mxu0 %v600
  %v1140 = vpop.f32.mrf.mxu0
  %v1141 = vadd.f32 %v1121, %v1140
  %1142 = vdwg.mxu0
  %1143 = vmatpush.msra.mxu0 %v842
  %1144 = vmatpush.msra.mxu0 %v841
  %1145 = vmatpush.msra.mxu0 %v840
  %1146 = vmatpush.msra.mxu0 %v839
  %1147 = vmatpush.msra.mxu0 %v838
  %1148 = vmatpush.msra.mxu0 %v837
  %1149 = vmatpush.msra.mxu0 %v836
  %1150 = vmatpush.msra.mxu0 %v835
  %1151 = vmatpush.msra.mxu0 %v834
  %1152 = vmatpush.msra.mxu0 %v833
  %1153 = vmatpush.msra.mxu0 %v832
  %1154 = vmatpush.msra.mxu0 %v831
  %1155 = vmatpush.msra.mxu0 %v830
  %1156 = vmatpush.msra.mxu0 %v829
  %1157 = vmatpush.msra.mxu0 %v828
  %1158 = vmatpush.msra.mxu0 %v827
  %1159 = vmatmul.f32.gmra.mxu0 %v601
  %v1160 = vpop.f32.mrf.mxu0
  %v1161 = vadd.f32 %v1141, %v1160
  %1162 = vdwg.mxu0
  %1163 = vmatpush.msra.mxu0 %v858
  %1164 = vmatpush.msra.mxu0 %v857
  %1165 = vmatpush.msra.mxu0 %v856
  %1166 = vmatpush.msra.mxu0 %v855
  %1167 = vmatpush.msra.mxu0 %v854
  %1168 = vmatpush.msra.mxu0 %v853
  %1169 = vmatpush.msra.mxu0 %v852
  %1170 = vmatpush.msra.mxu0 %v851
  %1171 = vmatpush.msra.mxu0 %v850
  %1172 = vmatpush.msra.mxu0 %v849
  %1173 = vmatpush.msra.mxu0 %v848
  %1174 = vmatpush.msra.mxu0 %v847
  %1175 = vmatpush.msra.mxu0 %v846
  %1176 = vmatpush.msra.mxu0 %v845
  %1177 = vmatpush.msra.mxu0 %v844
  %1178 = vmatpush.msra.mxu0 %v843
  %1179 = vmatmul.f32.gmra.mxu0 %v602
  %v1180 = vpop.f32.mrf.mxu0
  %v1181 = vadd.f32 %v1161, %v1180
  %1182 = vdwg.mxu0
  %v1183 = vadd.f32 %v163, %v1181
  %v1184 = vld [vmem:[%s11] sm:$0x1]
  %v1185 = vld [vmem:[%s12] sm:$0x1]
  %v1186 = vsel %vm101, %v1183, 0.0
  %1187 = vadd.xlane.f32.xlu0 %v1186
  %v1188 = vpop.xlane.xlu0 %1187
  %v1189 = vmul.f32 %v1188, %v136
  %v1190 = vsub.f32 %v1183, %v1189
  %v1191 = vmul.f32 %v1190, %v1190
  %v1192 = vsel %vm101, %v1191, 0.0
  %1193 = vadd.xlane.f32.xlu0 %v1192
  %v1194 = vpop.xlane.xlu0 %1193
  %v1195 = vmul.f32 %v1194, %v136
  %v1196 = vadd.f32 %v1195, 1e-05
  %v1197 = vrsqrt.pop %v1196
  %v1198 = vmul.f32 %v1197, %v1196
  %v1199 = vmul.f32 %v1198, %v1197
  %v1200 = vmul.f32 0.5, %v1199
  %v1201 = vsub.f32 1.5, %v1200
  %v1202 = vmul.f32 %v1197, %v1201
  %vm1203 = vweird.f32 %v1196
  %vm1204 = vweird.f32 %v1197
  %vm1205 = vmor %vm1203, %vm1204
  %v1206 = vsel %vm1205, %v1197, %v1202
  %v1207 = vmul.f32 %v1190, %v1206
  %v1209 = vperm.slane %v1184, 0
  %v1211 = vmul.f32 %v1207, %v1209
  %v1213 = vperm.slane %v1185, 0
  %v1215 = vadd.f32 %v1211, %v1213
  %s1216 = scalar_lea.vmem %s3, 32
  %v1217 = vld [vmem:[%s1216] sm:$0xff]
  %v1218 = vld [vmem:[%s1216 + $0x8] sm:$0xff]
  %v1219 = vld [vmem:[%s1216 + $0x10] sm:$0xff]
  %v1220 = vld [vmem:[%s1216 + $0x18] sm:$0xff]
  %s1221 = scalar_lea.vmem %s4, 1
  %v1222 = vld [vmem:[%s1221] sm:$0x1]
  %v1224 = vperm.slane %v1222, 0
  %v1227 = vsel %vm101, %v1215, 0
  %1229 = vmatpush.msra.mxu0 0.0
  %1230 = vmatpush.msra.mxu0 0.0
  %1231 = vmatpush.msra.mxu0 0.0
  %1232 = vmatpush.msra.mxu0 0.0
  %1233 = vmatpush.msra.mxu0 0.0
  %1234 = vmatpush.msra.mxu0 0.0
  %1235 = vmatpush.msra.mxu0 0.0
  %1236 = vmatpush.msra.mxu0 0.0
  %1237 = vmatpush.msra.mxu0 0.0
  %1238 = vmatpush.msra.mxu0 0.0
  %1239 = vmatpush.msra.mxu0 0.0
  %1240 = vmatpush.msra.mxu0 0.0
  %1241 = vmatpush.msra.mxu0 %v1220
  %1242 = vmatpush.msra.mxu0 %v1219
  %1243 = vmatpush.msra.mxu0 %v1218
  %1244 = vmatpush.msra.mxu0 %v1217
  %1245 = vmatmul.f32.gmra.mxu0 %v1227
  %v1246 = vpop.f32.mrf.mxu0
  %v1247 = vadd.f32 %v1224, %v1246
  %1248 = vdwg.mxu0
  %s1249 = scalar_lea.vmem %s9, 1
  %v1250 = vld [vmem:[%s1249] sm:$0x1]
  %s1251 = scalar_lea.vmem %s10, 1
  %v1252 = vld [vmem:[%s1251] sm:$0x1]
  %v1253 = vsel %vm101, %v1247, 0.0
  %1254 = vadd.xlane.f32.xlu0 %v1253
  %v1255 = vpop.xlane.xlu0 %1254
  %v1256 = vmul.f32 %v1255, %v136
  %v1257 = vsub.f32 %v1247, %v1256
  %v1258 = vmul.f32 %v1257, %v1257
  %v1259 = vsel %vm101, %v1258, 0.0
  %1260 = vadd.xlane.f32.xlu0 %v1259
  %v1261 = vpop.xlane.xlu0 %1260
  %v1262 = vmul.f32 %v1261, %v136
  %v1263 = vadd.f32 %v1262, 1e-05
  %v1264 = vrsqrt.pop %v1263
  %v1265 = vmul.f32 %v1264, %v1263
  %v1266 = vmul.f32 %v1265, %v1264
  %v1267 = vmul.f32 0.5, %v1266
  %v1268 = vsub.f32 1.5, %v1267
  %v1269 = vmul.f32 %v1264, %v1268
  %vm1270 = vweird.f32 %v1263
  %vm1271 = vweird.f32 %v1264
  %vm1272 = vmor %vm1270, %vm1271
  %v1273 = vsel %vm1272, %v1264, %v1269
  %v1274 = vmul.f32 %v1257, %v1273
  %v1276 = vperm.slane %v1250, 0
  %v1278 = vmul.f32 %v1274, %v1276
  %v1280 = vperm.slane %v1252, 0
  %v1282 = vadd.f32 %v1278, %v1280
  %s1283 = scalar_lea.vmem %s5, 512
  %v1284 = vld [vmem:[%s1283] sm:$0xff]
  %v1285 = vld [vmem:[%s1283 + $0x8] sm:$0xff]
  %v1286 = vld [vmem:[%s1283 + $0x10] sm:$0xff]
  %v1287 = vld [vmem:[%s1283 + $0x18] sm:$0xff]
  %v1288 = vld [vmem:[%s1283 + $0x20] sm:$0xff]
  %v1289 = vld [vmem:[%s1283 + $0x28] sm:$0xff]
  %v1290 = vld [vmem:[%s1283 + $0x30] sm:$0xff]
  %v1291 = vld [vmem:[%s1283 + $0x38] sm:$0xff]
  %v1292 = vld [vmem:[%s1283 + $0x40] sm:$0xff]
  %v1293 = vld [vmem:[%s1283 + $0x48] sm:$0xff]
  %v1294 = vld [vmem:[%s1283 + $0x50] sm:$0xff]
  %v1295 = vld [vmem:[%s1283 + $0x58] sm:$0xff]
  %v1296 = vld [vmem:[%s1283 + $0x60] sm:$0xff]
  %v1297 = vld [vmem:[%s1283 + $0x68] sm:$0xff]
  %v1298 = vld [vmem:[%s1283 + $0x70] sm:$0xff]
  %v1299 = vld [vmem:[%s1283 + $0x78] sm:$0xff]
  %v1300 = vld [vmem:[%s1283 + $0x80] sm:$0xff]
  %v1301 = vld [vmem:[%s1283 + $0x88] sm:$0xff]
  %v1302 = vld [vmem:[%s1283 + $0x90] sm:$0xff]
  %v1303 = vld [vmem:[%s1283 + $0x98] sm:$0xff]
  %v1304 = vld [vmem:[%s1283 + $0xa0] sm:$0xff]
  %v1305 = vld [vmem:[%s1283 + $0xa8] sm:$0xff]
  %v1306 = vld [vmem:[%s1283 + $0xb0] sm:$0xff]
  %v1307 = vld [vmem:[%s1283 + $0xb8] sm:$0xff]
  %v1308 = vld [vmem:[%s1283 + $0xc0] sm:$0xff]
  %v1309 = vld [vmem:[%s1283 + $0xc8] sm:$0xff]
  %v1310 = vld [vmem:[%s1283 + $0xd0] sm:$0xff]
  %v1311 = vld [vmem:[%s1283 + $0xd8] sm:$0xff]
  %v1312 = vld [vmem:[%s1283 + $0xe0] sm:$0xff]
  %v1313 = vld [vmem:[%s1283 + $0xe8] sm:$0xff]
  %v1314 = vld [vmem:[%s1283 + $0xf0] sm:$0xff]
  %v1315 = vld [vmem:[%s1283 + $0xf8] sm:$0xff]
  %v1316 = vld [vmem:[%s1283 + $0x100] sm:$0xff]
  %v1317 = vld [vmem:[%s1283 + $0x108] sm:$0xff]
  %v1318 = vld [vmem:[%s1283 + $0x110] sm:$0xff]
  %v1319 = vld [vmem:[%s1283 + $0x118] sm:$0xff]
  %v1320 = vld [vmem:[%s1283 + $0x120] sm:$0xff]
  %v1321 = vld [vmem:[%s1283 + $0x128] sm:$0xff]
  %v1322 = vld [vmem:[%s1283 + $0x130] sm:$0xff]
  %v1323 = vld [vmem:[%s1283 + $0x138] sm:$0xff]
  %v1324 = vld [vmem:[%s1283 + $0x140] sm:$0xff]
  %v1325 = vld [vmem:[%s1283 + $0x148] sm:$0xff]
  %v1326 = vld [vmem:[%s1283 + $0x150] sm:$0xff]
  %v1327 = vld [vmem:[%s1283 + $0x158] sm:$0xff]
  %v1328 = vld [vmem:[%s1283 + $0x160] sm:$0xff]
  %v1329 = vld [vmem:[%s1283 + $0x168] sm:$0xff]
  %v1330 = vld [vmem:[%s1283 + $0x170] sm:$0xff]
  %v1331 = vld [vmem:[%s1283 + $0x178] sm:$0xff]
  %v1332 = vld [vmem:[%s1283 + $0x180] sm:$0xff]
  %v1333 = vld [vmem:[%s1283 + $0x188] sm:$0xff]
  %v1334 = vld [vmem:[%s1283 + $0x190] sm:$0xff]
  %v1335 = vld [vmem:[%s1283 + $0x198] sm:$0xff]
  %v1336 = vld [vmem:[%s1283 + $0x1a0] sm:$0xff]
  %v1337 = vld [vmem:[%s1283 + $0x1a8] sm:$0xff]
  %v1338 = vld [vmem:[%s1283 + $0x1b0] sm:$0xff]
  %v1339 = vld [vmem:[%s1283 + $0x1b8] sm:$0xff]
  %v1340 = vld [vmem:[%s1283 + $0x1c0] sm:$0xff]
  %v1341 = vld [vmem:[%s1283 + $0x1c8] sm:$0xff]
  %v1342 = vld [vmem:[%s1283 + $0x1d0] sm:$0xff]
  %v1343 = vld [vmem:[%s1283 + $0x1d8] sm:$0xff]
  %v1344 = vld [vmem:[%s1283 + $0x1e0] sm:$0xff]
  %v1345 = vld [vmem:[%s1283 + $0x1e8] sm:$0xff]
  %v1346 = vld [vmem:[%s1283 + $0x1f0] sm:$0xff]
  %v1347 = vld [vmem:[%s1283 + $0x1f8] sm:$0xff]
  %s1348 = scalar_lea.vmem %s6, 16
  %v1349 = vld [vmem:[%s1348] sm:$0xff]
  %v1350 = vld [vmem:[%s1348 + $0x8] sm:$0xff]
  %v1353 = vperm.slane %v1349, 0
  %v1354 = vperm.slane %v1349, 1
  %v1355 = vperm.slane %v1349, 2
  %v1356 = vperm.slane %v1349, 3
  %v1357 = vperm.slane %v1349, 4
  %v1358 = vperm.slane %v1349, 5
  %v1359 = vperm.slane %v1349, 6
  %v1360 = vperm.slane %v1349, 7
  %v1361 = vperm.slane %v1350, 0
  %v1362 = vperm.slane %v1350, 1
  %v1363 = vperm.slane %v1350, 2
  %v1364 = vperm.slane %v1350, 3
  %v1365 = vperm.slane %v1350, 4
  %v1366 = vperm.slane %v1350, 5
  %v1367 = vperm.slane %v1350, 6
  %v1368 = vperm.slane %v1350, 7
  %v1386 = vsel %vm101, %v1282, 0
  %1388 = vmatpush.msra.mxu0 0.0
  %1389 = vmatpush.msra.mxu0 0.0
  %1390 = vmatpush.msra.mxu0 0.0
  %1391 = vmatpush.msra.mxu0 0.0
  %1392 = vmatpush.msra.mxu0 0.0
  %1393 = vmatpush.msra.mxu0 0.0
  %1394 = vmatpush.msra.mxu0 0.0
  %1395 = vmatpush.msra.mxu0 0.0
  %1396 = vmatpush.msra.mxu0 0.0
  %1397 = vmatpush.msra.mxu0 0.0
  %1398 = vmatpush.msra.mxu0 0.0
  %1399 = vmatpush.msra.mxu0 0.0
  %1400 = vmatpush.msra.mxu0 %v1332
  %1401 = vmatpush.msra.mxu0 %v1316
  %1402 = vmatpush.msra.mxu0 %v1300
  %1403 = vmatpush.msra.mxu0 %v1284
  %1404 = vmatmul.f32.gmra.mxu0 %v1386
  %v1405 = vpop.f32.mrf.mxu0
  %v1406 = vadd.f32 %v1353, %v1405
  %1407 = vdwg.mxu0
  %1408 = vmatpush.msra.mxu0 0.0
  %1409 = vmatpush.msra.mxu0 0.0
  %1410 = vmatpush.msra.mxu0 0.0
  %1411 = vmatpush.msra.mxu0 0.0
  %1412 = vmatpush.msra.mxu0 0.0
  %1413 = vmatpush.msra.mxu0 0.0
  %1414 = vmatpush.msra.mxu0 0.0
  %1415 = vmatpush.msra.mxu0 0.0
  %1416 = vmatpush.msra.mxu0 0.0
  %1417 = vmatpush.msra.mxu0 0.0
  %1418 = vmatpush.msra.mxu0 0.0
  %1419 = vmatpush.msra.mxu0 0.0
  %1420 = vmatpush.msra.mxu0 %v1333
  %1421 = vmatpush.msra.mxu0 %v1317
  %1422 = vmatpush.msra.mxu0 %v1301
  %1423 = vmatpush.msra.mxu0 %v1285
  %1424 = vmatmul.f32.gmra.mxu0 %v1386
  %v1425 = vpop.f32.mrf.mxu0
  %v1426 = vadd.f32 %v1354, %v1425
  %1427 = vdwg.mxu0
  %1428 = vmatpush.msra.mxu0 0.0
  %1429 = vmatpush.msra.mxu0 0.0
  %1430 = vmatpush.msra.mxu0 0.0
  %1431 = vmatpush.msra.mxu0 0.0
  %1432 = vmatpush.msra.mxu0 0.0
  %1433 = vmatpush.msra.mxu0 0.0
  %1434 = vmatpush.msra.mxu0 0.0
  %1435 = vmatpush.msra.mxu0 0.0
  %1436 = vmatpush.msra.mxu0 0.0
  %1437 = vmatpush.msra.mxu0 0.0
  %1438 = vmatpush.msra.mxu0 0.0
  %1439 = vmatpush.msra.mxu0 0.0
  %1440 = vmatpush.msra.mxu0 %v1334
  %1441 = vmatpush.msra.mxu0 %v1318
  %1442 = vmatpush.msra.mxu0 %v1302
  %1443 = vmatpush.msra.mxu0 %v1286
  %1444 = vmatmul.f32.gmra.mxu0 %v1386
  %v1445 = vpop.f32.mrf.mxu0
  %v1446 = vadd.f32 %v1355, %v1445
  %1447 = vdwg.mxu0
  %1448 = vmatpush.msra.mxu0 0.0
  %1449 = vmatpush.msra.mxu0 0.0
  %1450 = vmatpush.msra.mxu0 0.0
  %1451 = vmatpush.msra.mxu0 0.0
  %1452 = vmatpush.msra.mxu0 0.0
  %1453 = vmatpush.msra.mxu0 0.0
  %1454 = vmatpush.msra.mxu0 0.0
  %1455 = vmatpush.msra.mxu0 0.0
  %1456 = vmatpush.msra.mxu0 0.0
  %1457 = vmatpush.msra.mxu0 0.0
  %1458 = vmatpush.msra.mxu0 0.0
  %1459 = vmatpush.msra.mxu0 0.0
  %1460 = vmatpush.msra.mxu0 %v1335
  %1461 = vmatpush.msra.mxu0 %v1319
  %1462 = vmatpush.msra.mxu0 %v1303
  %1463 = vmatpush.msra.mxu0 %v1287
  %1464 = vmatmul.f32.gmra.mxu0 %v1386
  %v1465 = vpop.f32.mrf.mxu0
  %v1466 = vadd.f32 %v1356, %v1465
  %1467 = vdwg.mxu0
  %1468 = vmatpush.msra.mxu0 0.0
  %1469 = vmatpush.msra.mxu0 0.0
  %1470 = vmatpush.msra.mxu0 0.0
  %1471 = vmatpush.msra.mxu0 0.0
  %1472 = vmatpush.msra.mxu0 0.0
  %1473 = vmatpush.msra.mxu0 0.0
  %1474 = vmatpush.msra.mxu0 0.0
  %1475 = vmatpush.msra.mxu0 0.0
  %1476 = vmatpush.msra.mxu0 0.0
  %1477 = vmatpush.msra.mxu0 0.0
  %1478 = vmatpush.msra.mxu0 0.0
  %1479 = vmatpush.msra.mxu0 0.0
  %1480 = vmatpush.msra.mxu0 %v1336
  %1481 = vmatpush.msra.mxu0 %v1320
  %1482 = vmatpush.msra.mxu0 %v1304
  %1483 = vmatpush.msra.mxu0 %v1288
  %1484 = vmatmul.f32.gmra.mxu0 %v1386
  %v1485 = vpop.f32.mrf.mxu0
  %v1486 = vadd.f32 %v1357, %v1485
  %1487 = vdwg.mxu0
  %1488 = vmatpush.msra.mxu0 0.0
  %1489 = vmatpush.msra.mxu0 0.0
  %1490 = vmatpush.msra.mxu0 0.0
  %1491 = vmatpush.msra.mxu0 0.0
  %1492 = vmatpush.msra.mxu0 0.0
  %1493 = vmatpush.msra.mxu0 0.0
  %1494 = vmatpush.msra.mxu0 0.0
  %1495 = vmatpush.msra.mxu0 0.0
  %1496 = vmatpush.msra.mxu0 0.0
  %1497 = vmatpush.msra.mxu0 0.0
  %1498 = vmatpush.msra.mxu0 0.0
  %1499 = vmatpush.msra.mxu0 0.0
  %1500 = vmatpush.msra.mxu0 %v1337
  %1501 = vmatpush.msra.mxu0 %v1321
  %1502 = vmatpush.msra.mxu0 %v1305
  %1503 = vmatpush.msra.mxu0 %v1289
  %1504 = vmatmul.f32.gmra.mxu0 %v1386
  %v1505 = vpop.f32.mrf.mxu0
  %v1506 = vadd.f32 %v1358, %v1505
  %1507 = vdwg.mxu0
  %1508 = vmatpush.msra.mxu0 0.0
  %1509 = vmatpush.msra.mxu0 0.0
  %1510 = vmatpush.msra.mxu0 0.0
  %1511 = vmatpush.msra.mxu0 0.0
  %1512 = vmatpush.msra.mxu0 0.0
  %1513 = vmatpush.msra.mxu0 0.0
  %1514 = vmatpush.msra.mxu0 0.0
  %1515 = vmatpush.msra.mxu0 0.0
  %1516 = vmatpush.msra.mxu0 0.0
  %1517 = vmatpush.msra.mxu0 0.0
  %1518 = vmatpush.msra.mxu0 0.0
  %1519 = vmatpush.msra.mxu0 0.0
  %1520 = vmatpush.msra.mxu0 %v1338
  %1521 = vmatpush.msra.mxu0 %v1322
  %1522 = vmatpush.msra.mxu0 %v1306
  %1523 = vmatpush.msra.mxu0 %v1290
  %1524 = vmatmul.f32.gmra.mxu0 %v1386
  %v1525 = vpop.f32.mrf.mxu0
  %v1526 = vadd.f32 %v1359, %v1525
  %1527 = vdwg.mxu0
  %1528 = vmatpush.msra.mxu0 0.0
  %1529 = vmatpush.msra.mxu0 0.0
  %1530 = vmatpush.msra.mxu0 0.0
  %1531 = vmatpush.msra.mxu0 0.0
  %1532 = vmatpush.msra.mxu0 0.0
  %1533 = vmatpush.msra.mxu0 0.0
  %1534 = vmatpush.msra.mxu0 0.0
  %1535 = vmatpush.msra.mxu0 0.0
  %1536 = vmatpush.msra.mxu0 0.0
  %1537 = vmatpush.msra.mxu0 0.0
  %1538 = vmatpush.msra.mxu0 0.0
  %1539 = vmatpush.msra.mxu0 0.0
  %1540 = vmatpush.msra.mxu0 %v1339
  %1541 = vmatpush.msra.mxu0 %v1323
  %1542 = vmatpush.msra.mxu0 %v1307
  %1543 = vmatpush.msra.mxu0 %v1291
  %1544 = vmatmul.f32.gmra.mxu0 %v1386
  %v1545 = vpop.f32.mrf.mxu0
  %v1546 = vadd.f32 %v1360, %v1545
  %1547 = vdwg.mxu0
  %1548 = vmatpush.msra.mxu0 0.0
  %1549 = vmatpush.msra.mxu0 0.0
  %1550 = vmatpush.msra.mxu0 0.0
  %1551 = vmatpush.msra.mxu0 0.0
  %1552 = vmatpush.msra.mxu0 0.0
  %1553 = vmatpush.msra.mxu0 0.0
  %1554 = vmatpush.msra.mxu0 0.0
  %1555 = vmatpush.msra.mxu0 0.0
  %1556 = vmatpush.msra.mxu0 0.0
  %1557 = vmatpush.msra.mxu0 0.0
  %1558 = vmatpush.msra.mxu0 0.0
  %1559 = vmatpush.msra.mxu0 0.0
  %1560 = vmatpush.msra.mxu0 %v1340
  %1561 = vmatpush.msra.mxu0 %v1324
  %1562 = vmatpush.msra.mxu0 %v1308
  %1563 = vmatpush.msra.mxu0 %v1292
  %1564 = vmatmul.f32.gmra.mxu0 %v1386
  %v1565 = vpop.f32.mrf.mxu0
  %v1566 = vadd.f32 %v1361, %v1565
  %1567 = vdwg.mxu0
  %1568 = vmatpush.msra.mxu0 0.0
  %1569 = vmatpush.msra.mxu0 0.0
  %1570 = vmatpush.msra.mxu0 0.0
  %1571 = vmatpush.msra.mxu0 0.0
  %1572 = vmatpush.msra.mxu0 0.0
  %1573 = vmatpush.msra.mxu0 0.0
  %1574 = vmatpush.msra.mxu0 0.0
  %1575 = vmatpush.msra.mxu0 0.0
  %1576 = vmatpush.msra.mxu0 0.0
  %1577 = vmatpush.msra.mxu0 0.0
  %1578 = vmatpush.msra.mxu0 0.0
  %1579 = vmatpush.msra.mxu0 0.0
  %1580 = vmatpush.msra.mxu0 %v1341
  %1581 = vmatpush.msra.mxu0 %v1325
  %1582 = vmatpush.msra.mxu0 %v1309
  %1583 = vmatpush.msra.mxu0 %v1293
  %1584 = vmatmul.f32.gmra.mxu0 %v1386
  %v1585 = vpop.f32.mrf.mxu0
  %v1586 = vadd.f32 %v1362, %v1585
  %1587 = vdwg.mxu0
  %1588 = vmatpush.msra.mxu0 0.0
  %1589 = vmatpush.msra.mxu0 0.0
  %1590 = vmatpush.msra.mxu0 0.0
  %1591 = vmatpush.msra.mxu0 0.0
  %1592 = vmatpush.msra.mxu0 0.0
  %1593 = vmatpush.msra.mxu0 0.0
  %1594 = vmatpush.msra.mxu0 0.0
  %1595 = vmatpush.msra.mxu0 0.0
  %1596 = vmatpush.msra.mxu0 0.0
  %1597 = vmatpush.msra.mxu0 0.0
  %1598 = vmatpush.msra.mxu0 0.0
  %1599 = vmatpush.msra.mxu0 0.0
  %1600 = vmatpush.msra.mxu0 %v1342
  %1601 = vmatpush.msra.mxu0 %v1326
  %1602 = vmatpush.msra.mxu0 %v1310
  %1603 = vmatpush.msra.mxu0 %v1294
  %1604 = vmatmul.f32.gmra.mxu0 %v1386
  %v1605 = vpop.f32.mrf.mxu0
  %v1606 = vadd.f32 %v1363, %v1605
  %1607 = vdwg.mxu0
  %1608 = vmatpush.msra.mxu0 0.0
  %1609 = vmatpush.msra.mxu0 0.0
  %1610 = vmatpush.msra.mxu0 0.0
  %1611 = vmatpush.msra.mxu0 0.0
  %1612 = vmatpush.msra.mxu0 0.0
  %1613 = vmatpush.msra.mxu0 0.0
  %1614 = vmatpush.msra.mxu0 0.0
  %1615 = vmatpush.msra.mxu0 0.0
  %1616 = vmatpush.msra.mxu0 0.0
  %1617 = vmatpush.msra.mxu0 0.0
  %1618 = vmatpush.msra.mxu0 0.0
  %1619 = vmatpush.msra.mxu0 0.0
  %1620 = vmatpush.msra.mxu0 %v1343
  %1621 = vmatpush.msra.mxu0 %v1327
  %1622 = vmatpush.msra.mxu0 %v1311
  %1623 = vmatpush.msra.mxu0 %v1295
  %1624 = vmatmul.f32.gmra.mxu0 %v1386
  %v1625 = vpop.f32.mrf.mxu0
  %v1626 = vadd.f32 %v1364, %v1625
  %1627 = vdwg.mxu0
  %1628 = vmatpush.msra.mxu0 0.0
  %1629 = vmatpush.msra.mxu0 0.0
  %1630 = vmatpush.msra.mxu0 0.0
  %1631 = vmatpush.msra.mxu0 0.0
  %1632 = vmatpush.msra.mxu0 0.0
  %1633 = vmatpush.msra.mxu0 0.0
  %1634 = vmatpush.msra.mxu0 0.0
  %1635 = vmatpush.msra.mxu0 0.0
  %1636 = vmatpush.msra.mxu0 0.0
  %1637 = vmatpush.msra.mxu0 0.0
  %1638 = vmatpush.msra.mxu0 0.0
  %1639 = vmatpush.msra.mxu0 0.0
  %1640 = vmatpush.msra.mxu0 %v1344
  %1641 = vmatpush.msra.mxu0 %v1328
  %1642 = vmatpush.msra.mxu0 %v1312
  %1643 = vmatpush.msra.mxu0 %v1296
  %1644 = vmatmul.f32.gmra.mxu0 %v1386
  %v1645 = vpop.f32.mrf.mxu0
  %v1646 = vadd.f32 %v1365, %v1645
  %1647 = vdwg.mxu0
  %1648 = vmatpush.msra.mxu0 0.0
  %1649 = vmatpush.msra.mxu0 0.0
  %1650 = vmatpush.msra.mxu0 0.0
  %1651 = vmatpush.msra.mxu0 0.0
  %1652 = vmatpush.msra.mxu0 0.0
  %1653 = vmatpush.msra.mxu0 0.0
  %1654 = vmatpush.msra.mxu0 0.0
  %1655 = vmatpush.msra.mxu0 0.0
  %1656 = vmatpush.msra.mxu0 0.0
  %1657 = vmatpush.msra.mxu0 0.0
  %1658 = vmatpush.msra.mxu0 0.0
  %1659 = vmatpush.msra.mxu0 0.0
  %1660 = vmatpush.msra.mxu0 %v1345
  %1661 = vmatpush.msra.mxu0 %v1329
  %1662 = vmatpush.msra.mxu0 %v1313
  %1663 = vmatpush.msra.mxu0 %v1297
  %1664 = vmatmul.f32.gmra.mxu0 %v1386
  %v1665 = vpop.f32.mrf.mxu0
  %v1666 = vadd.f32 %v1366, %v1665
  %1667 = vdwg.mxu0
  %1668 = vmatpush.msra.mxu0 0.0
  %1669 = vmatpush.msra.mxu0 0.0
  %1670 = vmatpush.msra.mxu0 0.0
  %1671 = vmatpush.msra.mxu0 0.0
  %1672 = vmatpush.msra.mxu0 0.0
  %1673 = vmatpush.msra.mxu0 0.0
  %1674 = vmatpush.msra.mxu0 0.0
  %1675 = vmatpush.msra.mxu0 0.0
  %1676 = vmatpush.msra.mxu0 0.0
  %1677 = vmatpush.msra.mxu0 0.0
  %1678 = vmatpush.msra.mxu0 0.0
  %1679 = vmatpush.msra.mxu0 0.0
  %1680 = vmatpush.msra.mxu0 %v1346
  %1681 = vmatpush.msra.mxu0 %v1330
  %1682 = vmatpush.msra.mxu0 %v1314
  %1683 = vmatpush.msra.mxu0 %v1298
  %1684 = vmatmul.f32.gmra.mxu0 %v1386
  %v1685 = vpop.f32.mrf.mxu0
  %v1686 = vadd.f32 %v1367, %v1685
  %1687 = vdwg.mxu0
  %1688 = vmatpush.msra.mxu0 0.0
  %1689 = vmatpush.msra.mxu0 0.0
  %1690 = vmatpush.msra.mxu0 0.0
  %1691 = vmatpush.msra.mxu0 0.0
  %1692 = vmatpush.msra.mxu0 0.0
  %1693 = vmatpush.msra.mxu0 0.0
  %1694 = vmatpush.msra.mxu0 0.0
  %1695 = vmatpush.msra.mxu0 0.0
  %1696 = vmatpush.msra.mxu0 0.0
  %1697 = vmatpush.msra.mxu0 0.0
  %1698 = vmatpush.msra.mxu0 0.0
  %1699 = vmatpush.msra.mxu0 0.0
  %1700 = vmatpush.msra.mxu0 %v1347
  %1701 = vmatpush.msra.mxu0 %v1331
  %1702 = vmatpush.msra.mxu0 %v1315
  %1703 = vmatpush.msra.mxu0 %v1299
  %1704 = vmatmul.f32.gmra.mxu0 %v1386
  %v1705 = vpop.f32.mrf.mxu0
  %v1706 = vadd.f32 %v1368, %v1705
  %1707 = vdwg.mxu0
  %v1708 = vmax.f32 %v1406, 0.0
  %v1709 = vmax.f32 %v1426, 0.0
  %v1710 = vmax.f32 %v1446, 0.0
  %v1711 = vmax.f32 %v1466, 0.0
  %v1712 = vmax.f32 %v1486, 0.0
  %v1713 = vmax.f32 %v1506, 0.0
  %v1714 = vmax.f32 %v1526, 0.0
  %v1715 = vmax.f32 %v1546, 0.0
  %v1716 = vmax.f32 %v1566, 0.0
  %v1717 = vmax.f32 %v1586, 0.0
  %v1718 = vmax.f32 %v1606, 0.0
  %v1719 = vmax.f32 %v1626, 0.0
  %v1720 = vmax.f32 %v1646, 0.0
  %v1721 = vmax.f32 %v1666, 0.0
  %v1722 = vmax.f32 %v1686, 0.0
  %v1723 = vmax.f32 %v1706, 0.0
  %s1724 = scalar_lea.vmem %s7, 2048
  %v1725 = vld [vmem:[%s1724] sm:$0xff]
  %v1726 = vld [vmem:[%s1724 + $0x8] sm:$0xff]
  %v1727 = vld [vmem:[%s1724 + $0x10] sm:$0xff]
  %v1728 = vld [vmem:[%s1724 + $0x18] sm:$0xff]
  %v1729 = vld [vmem:[%s1724 + $0x20] sm:$0xff]
  %v1730 = vld [vmem:[%s1724 + $0x28] sm:$0xff]
  %v1731 = vld [vmem:[%s1724 + $0x30] sm:$0xff]
  %v1732 = vld [vmem:[%s1724 + $0x38] sm:$0xff]
  %v1733 = vld [vmem:[%s1724 + $0x40] sm:$0xff]
  %v1734 = vld [vmem:[%s1724 + $0x48] sm:$0xff]
  %v1735 = vld [vmem:[%s1724 + $0x50] sm:$0xff]
  %v1736 = vld [vmem:[%s1724 + $0x58] sm:$0xff]
  %v1737 = vld [vmem:[%s1724 + $0x60] sm:$0xff]
  %v1738 = vld [vmem:[%s1724 + $0x68] sm:$0xff]
  %v1739 = vld [vmem:[%s1724 + $0x70] sm:$0xff]
  %v1740 = vld [vmem:[%s1724 + $0x78] sm:$0xff]
  %v1741 = vld [vmem:[%s1724 + $0x80] sm:$0xff]
  %v1742 = vld [vmem:[%s1724 + $0x88] sm:$0xff]
  %v1743 = vld [vmem:[%s1724 + $0x90] sm:$0xff]
  %v1744 = vld [vmem:[%s1724 + $0x98] sm:$0xff]
  %v1745 = vld [vmem:[%s1724 + $0xa0] sm:$0xff]
  %v1746 = vld [vmem:[%s1724 + $0xa8] sm:$0xff]
  %v1747 = vld [vmem:[%s1724 + $0xb0] sm:$0xff]
  %v1748 = vld [vmem:[%s1724 + $0xb8] sm:$0xff]
  %v1749 = vld [vmem:[%s1724 + $0xc0] sm:$0xff]
  %v1750 = vld [vmem:[%s1724 + $0xc8] sm:$0xff]
  %v1751 = vld [vmem:[%s1724 + $0xd0] sm:$0xff]
  %v1752 = vld [vmem:[%s1724 + $0xd8] sm:$0xff]
  %v1753 = vld [vmem:[%s1724 + $0xe0] sm:$0xff]
  %v1754 = vld [vmem:[%s1724 + $0xe8] sm:$0xff]
  %v1755 = vld [vmem:[%s1724 + $0xf0] sm:$0xff]
  %v1756 = vld [vmem:[%s1724 + $0xf8] sm:$0xff]
  %v1757 = vld [vmem:[%s1724 + $0x100] sm:$0xff]
  %v1758 = vld [vmem:[%s1724 + $0x108] sm:$0xff]
  %v1759 = vld [vmem:[%s1724 + $0x110] sm:$0xff]
  %v1760 = vld [vmem:[%s1724 + $0x118] sm:$0xff]
  %v1761 = vld [vmem:[%s1724 + $0x120] sm:$0xff]
  %v1762 = vld [vmem:[%s1724 + $0x128] sm:$0xff]
  %v1763 = vld [vmem:[%s1724 + $0x130] sm:$0xff]
  %v1764 = vld [vmem:[%s1724 + $0x138] sm:$0xff]
  %v1765 = vld [vmem:[%s1724 + $0x140] sm:$0xff]
  %v1766 = vld [vmem:[%s1724 + $0x148] sm:$0xff]
  %v1767 = vld [vmem:[%s1724 + $0x150] sm:$0xff]
  %v1768 = vld [vmem:[%s1724 + $0x158] sm:$0xff]
  %v1769 = vld [vmem:[%s1724 + $0x160] sm:$0xff]
  %v1770 = vld [vmem:[%s1724 + $0x168] sm:$0xff]
  %v1771 = vld [vmem:[%s1724 + $0x170] sm:$0xff]
  %v1772 = vld [vmem:[%s1724 + $0x178] sm:$0xff]
  %v1773 = vld [vmem:[%s1724 + $0x180] sm:$0xff]
  %v1774 = vld [vmem:[%s1724 + $0x188] sm:$0xff]
  %v1775 = vld [vmem:[%s1724 + $0x190] sm:$0xff]
  %v1776 = vld [vmem:[%s1724 + $0x198] sm:$0xff]
  %v1777 = vld [vmem:[%s1724 + $0x1a0] sm:$0xff]
  %v1778 = vld [vmem:[%s1724 + $0x1a8] sm:$0xff]
  %v1779 = vld [vmem:[%s1724 + $0x1b0] sm:$0xff]
  %v1780 = vld [vmem:[%s1724 + $0x1b8] sm:$0xff]
  %v1781 = vld [vmem:[%s1724 + $0x1c0] sm:$0xff]
  %v1782 = vld [vmem:[%s1724 + $0x1c8] sm:$0xff]
  %v1783 = vld [vmem:[%s1724 + $0x1d0] sm:$0xff]
  %v1784 = vld [vmem:[%s1724 + $0x1d8] sm:$0xff]
  %v1785 = vld [vmem:[%s1724 + $0x1e0] sm:$0xff]
  %v1786 = vld [vmem:[%s1724 + $0x1e8] sm:$0xff]
  %v1787 = vld [vmem:[%s1724 + $0x1f0] sm:$0xff]
  %v1788 = vld [vmem:[%s1724 + $0x1f8] sm:$0xff]
  %v1789 = vld [vmem:[%s1724 + $0x200] sm:$0xff]
  %v1790 = vld [vmem:[%s1724 + $0x208] sm:$0xff]
  %v1791 = vld [vmem:[%s1724 + $0x210] sm:$0xff]
  %v1792 = vld [vmem:[%s1724 + $0x218] sm:$0xff]
  %v1793 = vld [vmem:[%s1724 + $0x220] sm:$0xff]
  %v1794 = vld [vmem:[%s1724 + $0x228] sm:$0xff]
  %v1795 = vld [vmem:[%s1724 + $0x230] sm:$0xff]
  %v1796 = vld [vmem:[%s1724 + $0x238] sm:$0xff]
  %v1797 = vld [vmem:[%s1724 + $0x240] sm:$0xff]
  %v1798 = vld [vmem:[%s1724 + $0x248] sm:$0xff]
  %v1799 = vld [vmem:[%s1724 + $0x250] sm:$0xff]
  %v1800 = vld [vmem:[%s1724 + $0x258] sm:$0xff]
  %v1801 = vld [vmem:[%s1724 + $0x260] sm:$0xff]
  %v1802 = vld [vmem:[%s1724 + $0x268] sm:$0xff]
  %v1803 = vld [vmem:[%s1724 + $0x270] sm:$0xff]
  %v1804 = vld [vmem:[%s1724 + $0x278] sm:$0xff]
  %v1805 = vld [vmem:[%s1724 + $0x280] sm:$0xff]
  %v1806 = vld [vmem:[%s1724 + $0x288] sm:$0xff]
  %v1807 = vld [vmem:[%s1724 + $0x290] sm:$0xff]
  %v1808 = vld [vmem:[%s1724 + $0x298] sm:$0xff]
  %v1809 = vld [vmem:[%s1724 + $0x2a0] sm:$0xff]
  %v1810 = vld [vmem:[%s1724 + $0x2a8] sm:$0xff]
  %v1811 = vld [vmem:[%s1724 + $0x2b0] sm:$0xff]
  %v1812 = vld [vmem:[%s1724 + $0x2b8] sm:$0xff]
  %v1813 = vld [vmem:[%s1724 + $0x2c0] sm:$0xff]
  %v1814 = vld [vmem:[%s1724 + $0x2c8] sm:$0xff]
  %v1815 = vld [vmem:[%s1724 + $0x2d0] sm:$0xff]
  %v1816 = vld [vmem:[%s1724 + $0x2d8] sm:$0xff]
  %v1817 = vld [vmem:[%s1724 + $0x2e0] sm:$0xff]
  %v1818 = vld [vmem:[%s1724 + $0x2e8] sm:$0xff]
  %v1819 = vld [vmem:[%s1724 + $0x2f0] sm:$0xff]
  %v1820 = vld [vmem:[%s1724 + $0x2f8] sm:$0xff]
  %v1821 = vld [vmem:[%s1724 + $0x300] sm:$0xff]
  %v1822 = vld [vmem:[%s1724 + $0x308] sm:$0xff]
  %v1823 = vld [vmem:[%s1724 + $0x310] sm:$0xff]
  %v1824 = vld [vmem:[%s1724 + $0x318] sm:$0xff]
  %v1825 = vld [vmem:[%s1724 + $0x320] sm:$0xff]
  %v1826 = vld [vmem:[%s1724 + $0x328] sm:$0xff]
  %v1827 = vld [vmem:[%s1724 + $0x330] sm:$0xff]
  %v1828 = vld [vmem:[%s1724 + $0x338] sm:$0xff]
  %v1829 = vld [vmem:[%s1724 + $0x340] sm:$0xff]
  %v1830 = vld [vmem:[%s1724 + $0x348] sm:$0xff]
  %v1831 = vld [vmem:[%s1724 + $0x350] sm:$0xff]
  %v1832 = vld [vmem:[%s1724 + $0x358] sm:$0xff]
  %v1833 = vld [vmem:[%s1724 + $0x360] sm:$0xff]
  %v1834 = vld [vmem:[%s1724 + $0x368] sm:$0xff]
  %v1835 = vld [vmem:[%s1724 + $0x370] sm:$0xff]
  %v1836 = vld [vmem:[%s1724 + $0x378] sm:$0xff]
  %v1837 = vld [vmem:[%s1724 + $0x380] sm:$0xff]
  %v1838 = vld [vmem:[%s1724 + $0x388] sm:$0xff]
  %v1839 = vld [vmem:[%s1724 + $0x390] sm:$0xff]
  %v1840 = vld [vmem:[%s1724 + $0x398] sm:$0xff]
  %v1841 = vld [vmem:[%s1724 + $0x3a0] sm:$0xff]
  %v1842 = vld [vmem:[%s1724 + $0x3a8] sm:$0xff]
  %v1843 = vld [vmem:[%s1724 + $0x3b0] sm:$0xff]
  %v1844 = vld [vmem:[%s1724 + $0x3b8] sm:$0xff]
  %v1845 = vld [vmem:[%s1724 + $0x3c0] sm:$0xff]
  %v1846 = vld [vmem:[%s1724 + $0x3c8] sm:$0xff]
  %v1847 = vld [vmem:[%s1724 + $0x3d0] sm:$0xff]
  %v1848 = vld [vmem:[%s1724 + $0x3d8] sm:$0xff]
  %v1849 = vld [vmem:[%s1724 + $0x3e0] sm:$0xff]
  %v1850 = vld [vmem:[%s1724 + $0x3e8] sm:$0xff]
  %v1851 = vld [vmem:[%s1724 + $0x3f0] sm:$0xff]
  %v1852 = vld [vmem:[%s1724 + $0x3f8] sm:$0xff]
  %v1853 = vld [vmem:[%s1724 + $0x400] sm:$0xff]
  %v1854 = vld [vmem:[%s1724 + $0x408] sm:$0xff]
  %v1855 = vld [vmem:[%s1724 + $0x410] sm:$0xff]
  %v1856 = vld [vmem:[%s1724 + $0x418] sm:$0xff]
  %v1857 = vld [vmem:[%s1724 + $0x420] sm:$0xff]
  %v1858 = vld [vmem:[%s1724 + $0x428] sm:$0xff]
  %v1859 = vld [vmem:[%s1724 + $0x430] sm:$0xff]
  %v1860 = vld [vmem:[%s1724 + $0x438] sm:$0xff]
  %v1861 = vld [vmem:[%s1724 + $0x440] sm:$0xff]
  %v1862 = vld [vmem:[%s1724 + $0x448] sm:$0xff]
  %v1863 = vld [vmem:[%s1724 + $0x450] sm:$0xff]
  %v1864 = vld [vmem:[%s1724 + $0x458] sm:$0xff]
  %v1865 = vld [vmem:[%s1724 + $0x460] sm:$0xff]
  %v1866 = vld [vmem:[%s1724 + $0x468] sm:$0xff]
  %v1867 = vld [vmem:[%s1724 + $0x470] sm:$0xff]
  %v1868 = vld [vmem:[%s1724 + $0x478] sm:$0xff]
  %v1869 = vld [vmem:[%s1724 + $0x480] sm:$0xff]
  %v1870 = vld [vmem:[%s1724 + $0x488] sm:$0xff]
  %v1871 = vld [vmem:[%s1724 + $0x490] sm:$0xff]
  %v1872 = vld [vmem:[%s1724 + $0x498] sm:$0xff]
  %v1873 = vld [vmem:[%s1724 + $0x4a0] sm:$0xff]
  %v1874 = vld [vmem:[%s1724 + $0x4a8] sm:$0xff]
  %v1875 = vld [vmem:[%s1724 + $0x4b0] sm:$0xff]
  %v1876 = vld [vmem:[%s1724 + $0x4b8] sm:$0xff]
  %v1877 = vld [vmem:[%s1724 + $0x4c0] sm:$0xff]
  %v1878 = vld [vmem:[%s1724 + $0x4c8] sm:$0xff]
  %v1879 = vld [vmem:[%s1724 + $0x4d0] sm:$0xff]
  %v1880 = vld [vmem:[%s1724 + $0x4d8] sm:$0xff]
  %v1881 = vld [vmem:[%s1724 + $0x4e0] sm:$0xff]
  %v1882 = vld [vmem:[%s1724 + $0x4e8] sm:$0xff]
  %v1883 = vld [vmem:[%s1724 + $0x4f0] sm:$0xff]
  %v1884 = vld [vmem:[%s1724 + $0x4f8] sm:$0xff]
  %v1885 = vld [vmem:[%s1724 + $0x500] sm:$0xff]
  %v1886 = vld [vmem:[%s1724 + $0x508] sm:$0xff]
  %v1887 = vld [vmem:[%s1724 + $0x510] sm:$0xff]
  %v1888 = vld [vmem:[%s1724 + $0x518] sm:$0xff]
  %v1889 = vld [vmem:[%s1724 + $0x520] sm:$0xff]
  %v1890 = vld [vmem:[%s1724 + $0x528] sm:$0xff]
  %v1891 = vld [vmem:[%s1724 + $0x530] sm:$0xff]
  %v1892 = vld [vmem:[%s1724 + $0x538] sm:$0xff]
  %v1893 = vld [vmem:[%s1724 + $0x540] sm:$0xff]
  %v1894 = vld [vmem:[%s1724 + $0x548] sm:$0xff]
  %v1895 = vld [vmem:[%s1724 + $0x550] sm:$0xff]
  %v1896 = vld [vmem:[%s1724 + $0x558] sm:$0xff]
  %v1897 = vld [vmem:[%s1724 + $0x560] sm:$0xff]
  %v1898 = vld [vmem:[%s1724 + $0x568] sm:$0xff]
  %v1899 = vld [vmem:[%s1724 + $0x570] sm:$0xff]
  %v1900 = vld [vmem:[%s1724 + $0x578] sm:$0xff]
  %v1901 = vld [vmem:[%s1724 + $0x580] sm:$0xff]
  %v1902 = vld [vmem:[%s1724 + $0x588] sm:$0xff]
  %v1903 = vld [vmem:[%s1724 + $0x590] sm:$0xff]
  %v1904 = vld [vmem:[%s1724 + $0x598] sm:$0xff]
  %v1905 = vld [vmem:[%s1724 + $0x5a0] sm:$0xff]
  %v1906 = vld [vmem:[%s1724 + $0x5a8] sm:$0xff]
  %v1907 = vld [vmem:[%s1724 + $0x5b0] sm:$0xff]
  %v1908 = vld [vmem:[%s1724 + $0x5b8] sm:$0xff]
  %v1909 = vld [vmem:[%s1724 + $0x5c0] sm:$0xff]
  %v1910 = vld [vmem:[%s1724 + $0x5c8] sm:$0xff]
  %v1911 = vld [vmem:[%s1724 + $0x5d0] sm:$0xff]
  %v1912 = vld [vmem:[%s1724 + $0x5d8] sm:$0xff]
  %v1913 = vld [vmem:[%s1724 + $0x5e0] sm:$0xff]
  %v1914 = vld [vmem:[%s1724 + $0x5e8] sm:$0xff]
  %v1915 = vld [vmem:[%s1724 + $0x5f0] sm:$0xff]
  %v1916 = vld [vmem:[%s1724 + $0x5f8] sm:$0xff]
  %v1917 = vld [vmem:[%s1724 + $0x600] sm:$0xff]
  %v1918 = vld [vmem:[%s1724 + $0x608] sm:$0xff]
  %v1919 = vld [vmem:[%s1724 + $0x610] sm:$0xff]
  %v1920 = vld [vmem:[%s1724 + $0x618] sm:$0xff]
  %v1921 = vld [vmem:[%s1724 + $0x620] sm:$0xff]
  %v1922 = vld [vmem:[%s1724 + $0x628] sm:$0xff]
  %v1923 = vld [vmem:[%s1724 + $0x630] sm:$0xff]
  %v1924 = vld [vmem:[%s1724 + $0x638] sm:$0xff]
  %v1925 = vld [vmem:[%s1724 + $0x640] sm:$0xff]
  %v1926 = vld [vmem:[%s1724 + $0x648] sm:$0xff]
  %v1927 = vld [vmem:[%s1724 + $0x650] sm:$0xff]
  %v1928 = vld [vmem:[%s1724 + $0x658] sm:$0xff]
  %v1929 = vld [vmem:[%s1724 + $0x660] sm:$0xff]
  %v1930 = vld [vmem:[%s1724 + $0x668] sm:$0xff]
  %v1931 = vld [vmem:[%s1724 + $0x670] sm:$0xff]
  %v1932 = vld [vmem:[%s1724 + $0x678] sm:$0xff]
  %v1933 = vld [vmem:[%s1724 + $0x680] sm:$0xff]
  %v1934 = vld [vmem:[%s1724 + $0x688] sm:$0xff]
  %v1935 = vld [vmem:[%s1724 + $0x690] sm:$0xff]
  %v1936 = vld [vmem:[%s1724 + $0x698] sm:$0xff]
  %v1937 = vld [vmem:[%s1724 + $0x6a0] sm:$0xff]
  %v1938 = vld [vmem:[%s1724 + $0x6a8] sm:$0xff]
  %v1939 = vld [vmem:[%s1724 + $0x6b0] sm:$0xff]
  %v1940 = vld [vmem:[%s1724 + $0x6b8] sm:$0xff]
  %v1941 = vld [vmem:[%s1724 + $0x6c0] sm:$0xff]
  %v1942 = vld [vmem:[%s1724 + $0x6c8] sm:$0xff]
  %v1943 = vld [vmem:[%s1724 + $0x6d0] sm:$0xff]
  %v1944 = vld [vmem:[%s1724 + $0x6d8] sm:$0xff]
  %v1945 = vld [vmem:[%s1724 + $0x6e0] sm:$0xff]
  %v1946 = vld [vmem:[%s1724 + $0x6e8] sm:$0xff]
  %v1947 = vld [vmem:[%s1724 + $0x6f0] sm:$0xff]
  %v1948 = vld [vmem:[%s1724 + $0x6f8] sm:$0xff]
  %v1949 = vld [vmem:[%s1724 + $0x700] sm:$0xff]
  %v1950 = vld [vmem:[%s1724 + $0x708] sm:$0xff]
  %v1951 = vld [vmem:[%s1724 + $0x710] sm:$0xff]
  %v1952 = vld [vmem:[%s1724 + $0x718] sm:$0xff]
  %v1953 = vld [vmem:[%s1724 + $0x720] sm:$0xff]
  %v1954 = vld [vmem:[%s1724 + $0x728] sm:$0xff]
  %v1955 = vld [vmem:[%s1724 + $0x730] sm:$0xff]
  %v1956 = vld [vmem:[%s1724 + $0x738] sm:$0xff]
  %v1957 = vld [vmem:[%s1724 + $0x740] sm:$0xff]
  %v1958 = vld [vmem:[%s1724 + $0x748] sm:$0xff]
  %v1959 = vld [vmem:[%s1724 + $0x750] sm:$0xff]
  %v1960 = vld [vmem:[%s1724 + $0x758] sm:$0xff]
  %v1961 = vld [vmem:[%s1724 + $0x760] sm:$0xff]
  %v1962 = vld [vmem:[%s1724 + $0x768] sm:$0xff]
  %v1963 = vld [vmem:[%s1724 + $0x770] sm:$0xff]
  %v1964 = vld [vmem:[%s1724 + $0x778] sm:$0xff]
  %v1965 = vld [vmem:[%s1724 + $0x780] sm:$0xff]
  %v1966 = vld [vmem:[%s1724 + $0x788] sm:$0xff]
  %v1967 = vld [vmem:[%s1724 + $0x790] sm:$0xff]
  %v1968 = vld [vmem:[%s1724 + $0x798] sm:$0xff]
  %v1969 = vld [vmem:[%s1724 + $0x7a0] sm:$0xff]
  %v1970 = vld [vmem:[%s1724 + $0x7a8] sm:$0xff]
  %v1971 = vld [vmem:[%s1724 + $0x7b0] sm:$0xff]
  %v1972 = vld [vmem:[%s1724 + $0x7b8] sm:$0xff]
  %v1973 = vld [vmem:[%s1724 + $0x7c0] sm:$0xff]
  %v1974 = vld [vmem:[%s1724 + $0x7c8] sm:$0xff]
  %v1975 = vld [vmem:[%s1724 + $0x7d0] sm:$0xff]
  %v1976 = vld [vmem:[%s1724 + $0x7d8] sm:$0xff]
  %v1977 = vld [vmem:[%s1724 + $0x7e0] sm:$0xff]
  %v1978 = vld [vmem:[%s1724 + $0x7e8] sm:$0xff]
  %v1979 = vld [vmem:[%s1724 + $0x7f0] sm:$0xff]
  %v1980 = vld [vmem:[%s1724 + $0x7f8] sm:$0xff]
  %s1981 = scalar_lea.vmem %s8, 1
  %v1982 = vld [vmem:[%s1981] sm:$0x1]
  %v1984 = vperm.slane %v1982, 0
  %1986 = vmatpush.msra.mxu0 %v1740
  %1987 = vmatpush.msra.mxu0 %v1739
  %1988 = vmatpush.msra.mxu0 %v1738
  %1989 = vmatpush.msra.mxu0 %v1737
  %1990 = vmatpush.msra.mxu0 %v1736
  %1991 = vmatpush.msra.mxu0 %v1735
  %1992 = vmatpush.msra.mxu0 %v1734
  %1993 = vmatpush.msra.mxu0 %v1733
  %1994 = vmatpush.msra.mxu0 %v1732
  %1995 = vmatpush.msra.mxu0 %v1731
  %1996 = vmatpush.msra.mxu0 %v1730
  %1997 = vmatpush.msra.mxu0 %v1729
  %1998 = vmatpush.msra.mxu0 %v1728
  %1999 = vmatpush.msra.mxu0 %v1727
  %2000 = vmatpush.msra.mxu0 %v1726
  %2001 = vmatpush.msra.mxu0 %v1725
  %2002 = vmatmul.f32.gmra.mxu0 %v1708
  %v2003 = vpop.f32.mrf.mxu0
  %v2004 = vadd.f32 %v1984, %v2003
  %2005 = vdwg.mxu0
  %2006 = vmatpush.msra.mxu0 %v1756
  %2007 = vmatpush.msra.mxu0 %v1755
  %2008 = vmatpush.msra.mxu0 %v1754
  %2009 = vmatpush.msra.mxu0 %v1753
  %2010 = vmatpush.msra.mxu0 %v1752
  %2011 = vmatpush.msra.mxu0 %v1751
  %2012 = vmatpush.msra.mxu0 %v1750
  %2013 = vmatpush.msra.mxu0 %v1749
  %2014 = vmatpush.msra.mxu0 %v1748
  %2015 = vmatpush.msra.mxu0 %v1747
  %2016 = vmatpush.msra.mxu0 %v1746
  %2017 = vmatpush.msra.mxu0 %v1745
  %2018 = vmatpush.msra.mxu0 %v1744
  %2019 = vmatpush.msra.mxu0 %v1743
  %2020 = vmatpush.msra.mxu0 %v1742
  %2021 = vmatpush.msra.mxu0 %v1741
  %2022 = vmatmul.f32.gmra.mxu0 %v1709
  %v2023 = vpop.f32.mrf.mxu0
  %v2024 = vadd.f32 %v2004, %v2023
  %2025 = vdwg.mxu0
  %2026 = vmatpush.msra.mxu0 %v1772
  %2027 = vmatpush.msra.mxu0 %v1771
  %2028 = vmatpush.msra.mxu0 %v1770
  %2029 = vmatpush.msra.mxu0 %v1769
  %2030 = vmatpush.msra.mxu0 %v1768
  %2031 = vmatpush.msra.mxu0 %v1767
  %2032 = vmatpush.msra.mxu0 %v1766
  %2033 = vmatpush.msra.mxu0 %v1765
  %2034 = vmatpush.msra.mxu0 %v1764
  %2035 = vmatpush.msra.mxu0 %v1763
  %2036 = vmatpush.msra.mxu0 %v1762
  %2037 = vmatpush.msra.mxu0 %v1761
  %2038 = vmatpush.msra.mxu0 %v1760
  %2039 = vmatpush.msra.mxu0 %v1759
  %2040 = vmatpush.msra.mxu0 %v1758
  %2041 = vmatpush.msra.mxu0 %v1757
  %2042 = vmatmul.f32.gmra.mxu0 %v1710
  %v2043 = vpop.f32.mrf.mxu0
  %v2044 = vadd.f32 %v2024, %v2043
  %2045 = vdwg.mxu0
  %2046 = vmatpush.msra.mxu0 %v1788
  %2047 = vmatpush.msra.mxu0 %v1787
  %2048 = vmatpush.msra.mxu0 %v1786
  %2049 = vmatpush.msra.mxu0 %v1785
  %2050 = vmatpush.msra.mxu0 %v1784
  %2051 = vmatpush.msra.mxu0 %v1783
  %2052 = vmatpush.msra.mxu0 %v1782
  %2053 = vmatpush.msra.mxu0 %v1781
  %2054 = vmatpush.msra.mxu0 %v1780
  %2055 = vmatpush.msra.mxu0 %v1779
  %2056 = vmatpush.msra.mxu0 %v1778
  %2057 = vmatpush.msra.mxu0 %v1777
  %2058 = vmatpush.msra.mxu0 %v1776
  %2059 = vmatpush.msra.mxu0 %v1775
  %2060 = vmatpush.msra.mxu0 %v1774
  %2061 = vmatpush.msra.mxu0 %v1773
  %2062 = vmatmul.f32.gmra.mxu0 %v1711
  %v2063 = vpop.f32.mrf.mxu0
  %v2064 = vadd.f32 %v2044, %v2063
  %2065 = vdwg.mxu0
  %2066 = vmatpush.msra.mxu0 %v1804
  %2067 = vmatpush.msra.mxu0 %v1803
  %2068 = vmatpush.msra.mxu0 %v1802
  %2069 = vmatpush.msra.mxu0 %v1801
  %2070 = vmatpush.msra.mxu0 %v1800
  %2071 = vmatpush.msra.mxu0 %v1799
  %2072 = vmatpush.msra.mxu0 %v1798
  %2073 = vmatpush.msra.mxu0 %v1797
  %2074 = vmatpush.msra.mxu0 %v1796
  %2075 = vmatpush.msra.mxu0 %v1795
  %2076 = vmatpush.msra.mxu0 %v1794
  %2077 = vmatpush.msra.mxu0 %v1793
  %2078 = vmatpush.msra.mxu0 %v1792
  %2079 = vmatpush.msra.mxu0 %v1791
  %2080 = vmatpush.msra.mxu0 %v1790
  %2081 = vmatpush.msra.mxu0 %v1789
  %2082 = vmatmul.f32.gmra.mxu0 %v1712
  %v2083 = vpop.f32.mrf.mxu0
  %v2084 = vadd.f32 %v2064, %v2083
  %2085 = vdwg.mxu0
  %2086 = vmatpush.msra.mxu0 %v1820
  %2087 = vmatpush.msra.mxu0 %v1819
  %2088 = vmatpush.msra.mxu0 %v1818
  %2089 = vmatpush.msra.mxu0 %v1817
  %2090 = vmatpush.msra.mxu0 %v1816
  %2091 = vmatpush.msra.mxu0 %v1815
  %2092 = vmatpush.msra.mxu0 %v1814
  %2093 = vmatpush.msra.mxu0 %v1813
  %2094 = vmatpush.msra.mxu0 %v1812
  %2095 = vmatpush.msra.mxu0 %v1811
  %2096 = vmatpush.msra.mxu0 %v1810
  %2097 = vmatpush.msra.mxu0 %v1809
  %2098 = vmatpush.msra.mxu0 %v1808
  %2099 = vmatpush.msra.mxu0 %v1807
  %2100 = vmatpush.msra.mxu0 %v1806
  %2101 = vmatpush.msra.mxu0 %v1805
  %2102 = vmatmul.f32.gmra.mxu0 %v1713
  %v2103 = vpop.f32.mrf.mxu0
  %v2104 = vadd.f32 %v2084, %v2103
  %2105 = vdwg.mxu0
  %2106 = vmatpush.msra.mxu0 %v1836
  %2107 = vmatpush.msra.mxu0 %v1835
  %2108 = vmatpush.msra.mxu0 %v1834
  %2109 = vmatpush.msra.mxu0 %v1833
  %2110 = vmatpush.msra.mxu0 %v1832
  %2111 = vmatpush.msra.mxu0 %v1831
  %2112 = vmatpush.msra.mxu0 %v1830
  %2113 = vmatpush.msra.mxu0 %v1829
  %2114 = vmatpush.msra.mxu0 %v1828
  %2115 = vmatpush.msra.mxu0 %v1827
  %2116 = vmatpush.msra.mxu0 %v1826
  %2117 = vmatpush.msra.mxu0 %v1825
  %2118 = vmatpush.msra.mxu0 %v1824
  %2119 = vmatpush.msra.mxu0 %v1823
  %2120 = vmatpush.msra.mxu0 %v1822
  %2121 = vmatpush.msra.mxu0 %v1821
  %2122 = vmatmul.f32.gmra.mxu0 %v1714
  %v2123 = vpop.f32.mrf.mxu0
  %v2124 = vadd.f32 %v2104, %v2123
  %2125 = vdwg.mxu0
  %2126 = vmatpush.msra.mxu0 %v1852
  %2127 = vmatpush.msra.mxu0 %v1851
  %2128 = vmatpush.msra.mxu0 %v1850
  %2129 = vmatpush.msra.mxu0 %v1849
  %2130 = vmatpush.msra.mxu0 %v1848
  %2131 = vmatpush.msra.mxu0 %v1847
  %2132 = vmatpush.msra.mxu0 %v1846
  %2133 = vmatpush.msra.mxu0 %v1845
  %2134 = vmatpush.msra.mxu0 %v1844
  %2135 = vmatpush.msra.mxu0 %v1843
  %2136 = vmatpush.msra.mxu0 %v1842
  %2137 = vmatpush.msra.mxu0 %v1841
  %2138 = vmatpush.msra.mxu0 %v1840
  %2139 = vmatpush.msra.mxu0 %v1839
  %2140 = vmatpush.msra.mxu0 %v1838
  %2141 = vmatpush.msra.mxu0 %v1837
  %2142 = vmatmul.f32.gmra.mxu0 %v1715
  %v2143 = vpop.f32.mrf.mxu0
  %v2144 = vadd.f32 %v2124, %v2143
  %2145 = vdwg.mxu0
  %2146 = vmatpush.msra.mxu0 %v1868
  %2147 = vmatpush.msra.mxu0 %v1867
  %2148 = vmatpush.msra.mxu0 %v1866
  %2149 = vmatpush.msra.mxu0 %v1865
  %2150 = vmatpush.msra.mxu0 %v1864
  %2151 = vmatpush.msra.mxu0 %v1863
  %2152 = vmatpush.msra.mxu0 %v1862
  %2153 = vmatpush.msra.mxu0 %v1861
  %2154 = vmatpush.msra.mxu0 %v1860
  %2155 = vmatpush.msra.mxu0 %v1859
  %2156 = vmatpush.msra.mxu0 %v1858
  %2157 = vmatpush.msra.mxu0 %v1857
  %2158 = vmatpush.msra.mxu0 %v1856
  %2159 = vmatpush.msra.mxu0 %v1855
  %2160 = vmatpush.msra.mxu0 %v1854
  %2161 = vmatpush.msra.mxu0 %v1853
  %2162 = vmatmul.f32.gmra.mxu0 %v1716
  %v2163 = vpop.f32.mrf.mxu0
  %v2164 = vadd.f32 %v2144, %v2163
  %2165 = vdwg.mxu0
  %2166 = vmatpush.msra.mxu0 %v1884
  %2167 = vmatpush.msra.mxu0 %v1883
  %2168 = vmatpush.msra.mxu0 %v1882
  %2169 = vmatpush.msra.mxu0 %v1881
  %2170 = vmatpush.msra.mxu0 %v1880
  %2171 = vmatpush.msra.mxu0 %v1879
  %2172 = vmatpush.msra.mxu0 %v1878
  %2173 = vmatpush.msra.mxu0 %v1877
  %2174 = vmatpush.msra.mxu0 %v1876
  %2175 = vmatpush.msra.mxu0 %v1875
  %2176 = vmatpush.msra.mxu0 %v1874
  %2177 = vmatpush.msra.mxu0 %v1873
  %2178 = vmatpush.msra.mxu0 %v1872
  %2179 = vmatpush.msra.mxu0 %v1871
  %2180 = vmatpush.msra.mxu0 %v1870
  %2181 = vmatpush.msra.mxu0 %v1869
  %2182 = vmatmul.f32.gmra.mxu0 %v1717
  %v2183 = vpop.f32.mrf.mxu0
  %v2184 = vadd.f32 %v2164, %v2183
  %2185 = vdwg.mxu0
  %2186 = vmatpush.msra.mxu0 %v1900
  %2187 = vmatpush.msra.mxu0 %v1899
  %2188 = vmatpush.msra.mxu0 %v1898
  %2189 = vmatpush.msra.mxu0 %v1897
  %2190 = vmatpush.msra.mxu0 %v1896
  %2191 = vmatpush.msra.mxu0 %v1895
  %2192 = vmatpush.msra.mxu0 %v1894
  %2193 = vmatpush.msra.mxu0 %v1893
  %2194 = vmatpush.msra.mxu0 %v1892
  %2195 = vmatpush.msra.mxu0 %v1891
  %2196 = vmatpush.msra.mxu0 %v1890
  %2197 = vmatpush.msra.mxu0 %v1889
  %2198 = vmatpush.msra.mxu0 %v1888
  %2199 = vmatpush.msra.mxu0 %v1887
  %2200 = vmatpush.msra.mxu0 %v1886
  %2201 = vmatpush.msra.mxu0 %v1885
  %2202 = vmatmul.f32.gmra.mxu0 %v1718
  %v2203 = vpop.f32.mrf.mxu0
  %v2204 = vadd.f32 %v2184, %v2203
  %2205 = vdwg.mxu0
  %2206 = vmatpush.msra.mxu0 %v1916
  %2207 = vmatpush.msra.mxu0 %v1915
  %2208 = vmatpush.msra.mxu0 %v1914
  %2209 = vmatpush.msra.mxu0 %v1913
  %2210 = vmatpush.msra.mxu0 %v1912
  %2211 = vmatpush.msra.mxu0 %v1911
  %2212 = vmatpush.msra.mxu0 %v1910
  %2213 = vmatpush.msra.mxu0 %v1909
  %2214 = vmatpush.msra.mxu0 %v1908
  %2215 = vmatpush.msra.mxu0 %v1907
  %2216 = vmatpush.msra.mxu0 %v1906
  %2217 = vmatpush.msra.mxu0 %v1905
  %2218 = vmatpush.msra.mxu0 %v1904
  %2219 = vmatpush.msra.mxu0 %v1903
  %2220 = vmatpush.msra.mxu0 %v1902
  %2221 = vmatpush.msra.mxu0 %v1901
  %2222 = vmatmul.f32.gmra.mxu0 %v1719
  %v2223 = vpop.f32.mrf.mxu0
  %v2224 = vadd.f32 %v2204, %v2223
  %2225 = vdwg.mxu0
  %2226 = vmatpush.msra.mxu0 %v1932
  %2227 = vmatpush.msra.mxu0 %v1931
  %2228 = vmatpush.msra.mxu0 %v1930
  %2229 = vmatpush.msra.mxu0 %v1929
  %2230 = vmatpush.msra.mxu0 %v1928
  %2231 = vmatpush.msra.mxu0 %v1927
  %2232 = vmatpush.msra.mxu0 %v1926
  %2233 = vmatpush.msra.mxu0 %v1925
  %2234 = vmatpush.msra.mxu0 %v1924
  %2235 = vmatpush.msra.mxu0 %v1923
  %2236 = vmatpush.msra.mxu0 %v1922
  %2237 = vmatpush.msra.mxu0 %v1921
  %2238 = vmatpush.msra.mxu0 %v1920
  %2239 = vmatpush.msra.mxu0 %v1919
  %2240 = vmatpush.msra.mxu0 %v1918
  %2241 = vmatpush.msra.mxu0 %v1917
  %2242 = vmatmul.f32.gmra.mxu0 %v1720
  %v2243 = vpop.f32.mrf.mxu0
  %v2244 = vadd.f32 %v2224, %v2243
  %2245 = vdwg.mxu0
  %2246 = vmatpush.msra.mxu0 %v1948
  %2247 = vmatpush.msra.mxu0 %v1947
  %2248 = vmatpush.msra.mxu0 %v1946
  %2249 = vmatpush.msra.mxu0 %v1945
  %2250 = vmatpush.msra.mxu0 %v1944
  %2251 = vmatpush.msra.mxu0 %v1943
  %2252 = vmatpush.msra.mxu0 %v1942
  %2253 = vmatpush.msra.mxu0 %v1941
  %2254 = vmatpush.msra.mxu0 %v1940
  %2255 = vmatpush.msra.mxu0 %v1939
  %2256 = vmatpush.msra.mxu0 %v1938
  %2257 = vmatpush.msra.mxu0 %v1937
  %2258 = vmatpush.msra.mxu0 %v1936
  %2259 = vmatpush.msra.mxu0 %v1935
  %2260 = vmatpush.msra.mxu0 %v1934
  %2261 = vmatpush.msra.mxu0 %v1933
  %2262 = vmatmul.f32.gmra.mxu0 %v1721
  %v2263 = vpop.f32.mrf.mxu0
  %v2264 = vadd.f32 %v2244, %v2263
  %2265 = vdwg.mxu0
  %2266 = vmatpush.msra.mxu0 %v1964
  %2267 = vmatpush.msra.mxu0 %v1963
  %2268 = vmatpush.msra.mxu0 %v1962
  %2269 = vmatpush.msra.mxu0 %v1961
  %2270 = vmatpush.msra.mxu0 %v1960
  %2271 = vmatpush.msra.mxu0 %v1959
  %2272 = vmatpush.msra.mxu0 %v1958
  %2273 = vmatpush.msra.mxu0 %v1957
  %2274 = vmatpush.msra.mxu0 %v1956
  %2275 = vmatpush.msra.mxu0 %v1955
  %2276 = vmatpush.msra.mxu0 %v1954
  %2277 = vmatpush.msra.mxu0 %v1953
  %2278 = vmatpush.msra.mxu0 %v1952
  %2279 = vmatpush.msra.mxu0 %v1951
  %2280 = vmatpush.msra.mxu0 %v1950
  %2281 = vmatpush.msra.mxu0 %v1949
  %2282 = vmatmul.f32.gmra.mxu0 %v1722
  %v2283 = vpop.f32.mrf.mxu0
  %v2284 = vadd.f32 %v2264, %v2283
  %2285 = vdwg.mxu0
  %2286 = vmatpush.msra.mxu0 %v1980
  %2287 = vmatpush.msra.mxu0 %v1979
  %2288 = vmatpush.msra.mxu0 %v1978
  %2289 = vmatpush.msra.mxu0 %v1977
  %2290 = vmatpush.msra.mxu0 %v1976
  %2291 = vmatpush.msra.mxu0 %v1975
  %2292 = vmatpush.msra.mxu0 %v1974
  %2293 = vmatpush.msra.mxu0 %v1973
  %2294 = vmatpush.msra.mxu0 %v1972
  %2295 = vmatpush.msra.mxu0 %v1971
  %2296 = vmatpush.msra.mxu0 %v1970
  %2297 = vmatpush.msra.mxu0 %v1969
  %2298 = vmatpush.msra.mxu0 %v1968
  %2299 = vmatpush.msra.mxu0 %v1967
  %2300 = vmatpush.msra.mxu0 %v1966
  %2301 = vmatpush.msra.mxu0 %v1965
  %2302 = vmatmul.f32.gmra.mxu0 %v1723
  %v2303 = vpop.f32.mrf.mxu0
  %v2304 = vadd.f32 %v2284, %v2303
  %2305 = vdwg.mxu0
  %v2306 = vadd.f32 %v1282, %v2304
  %s2307 = scalar_lea.vmem %s11, 1
  %v2308 = vld [vmem:[%s2307] sm:$0x1]
  %s2309 = scalar_lea.vmem %s12, 1
  %v2310 = vld [vmem:[%s2309] sm:$0x1]
  %v2311 = vsel %vm101, %v2306, 0.0
  %2312 = vadd.xlane.f32.xlu0 %v2311
  %v2313 = vpop.xlane.xlu0 %2312
  %v2314 = vmul.f32 %v2313, %v136
  %v2315 = vsub.f32 %v2306, %v2314
  %v2316 = vmul.f32 %v2315, %v2315
  %v2317 = vsel %vm101, %v2316, 0.0
  %2318 = vadd.xlane.f32.xlu0 %v2317
  %v2319 = vpop.xlane.xlu0 %2318
  %v2320 = vmul.f32 %v2319, %v136
  %v2321 = vadd.f32 %v2320, 1e-05
  %v2322 = vrsqrt.pop %v2321
  %v2323 = vmul.f32 %v2322, %v2321
  %v2324 = vmul.f32 %v2323, %v2322
  %v2325 = vmul.f32 0.5, %v2324
  %v2326 = vsub.f32 1.5, %v2325
  %v2327 = vmul.f32 %v2322, %v2326
  %vm2328 = vweird.f32 %v2321
  %vm2329 = vweird.f32 %v2322
  %vm2330 = vmor %vm2328, %vm2329
  %v2331 = vsel %vm2330, %v2322, %v2327
  %v2332 = vmul.f32 %v2315, %v2331
  %v2334 = vperm.slane %v2308, 0
  %v2336 = vmul.f32 %v2332, %v2334
  %v2338 = vperm.slane %v2310, 0
  %v2340 = vadd.f32 %v2336, %v2338
  %v2341 = vld [vmem:[%s13] sm:$0x1]
  %v2343 = vperm.slane %v2341, 0
  %v2345 = vmul.f32 %v2340, %v2343
  %v2346 = vsel %vm101, %v2345, 0.0
  %2347 = vadd.xlane.f32.xlu0 %v2346
  %v2348 = vpop.xlane.xlu0 %2347
  %v2349 = vld [vmem:[#allocation2] sm:$0x1]
  %v2351 = vperm.slane %v2349, 0
  %v2353 = vadd.f32 %v2348, %v2351
  %vm2354 = vcmask 7168
  %2355 = vst.msk [vmem:[%s15] sm:$0xff] %vm2354, %v2353
  // Predicated region
  $region62: #{tpu_custom_call.1} parent=0 // pred_check
    _
  $region63: #{tpu_custom_call.1} parent=0 // pred_check_branch
    %2357 = sbr.rel (0) target = $region65
  $region64: #{tpu_custom_call.1} parent=0 // pred_region
    _
  $region65: #{tpu_custom_call.1} parent=0 // pred_fallthru
    _
  // Predicated region
  $region66: #{tpu_custom_call.1} parent=0 // pred_check
    _
  $region67: #{tpu_custom_call.1} parent=0 // pred_check_branch
    %2359 = sbr.rel (0) target = $region69
  $region68: #{tpu_custom_call.1} parent=0 // pred_region
    _
  $region69: #{tpu_custom_call.1} parent=0 // pred_fallthru
    _

</llo_original>
